<compile_context>
chip_gen: v6e
topology: v6e:2x2x1
jax: 0.10.0
libtpu: 0.0.40
codegen_flags: <defaults>
</compile_context>

<pallas_src>
import jax
import jax.numpy as jnp
from jax.experimental import pallas as pl
from jax.experimental.pallas import tpu as pltpu

NUM_FEATURES = 1024
HIDDEN_LSTM = 256 * 2  # 512


def _round_up(n, m):
    return (n + m - 1) // m * m


def finger_encoder_kernel(x_ref, w1_ref, b1_ref, w2_ref, b2_ref, o_ref):
    # Cast activations to bf16 in-kernel (saves a wrapper-side HBM pass over x);
    # both matmuls accumulate in f32 on the MXU.
    x_bf = x_ref[...].astype(jnp.bfloat16)
    # fc1: (TM, 1024)bf16 @ (1024, 512)bf16 -> f32
    h = jnp.dot(x_bf, w1_ref[...], preferred_element_type=jnp.float32)
    h = jnp.maximum(h + b1_ref[...], 0.0)
    # dropout(p=0.1): identity in eval/inference mode
    # TODO(synk): training-mode dropout would need pltpu.prng_seed + stateful_bernoulli
    # fc2: (TM, 512)bf16 @ (512, Hp)bf16 -> f32
    out = jnp.dot(h.astype(jnp.bfloat16), w2_ref[...],
                  preferred_element_type=jnp.float32)
    o_ref[...] = (out + b2_ref[...]).astype(o_ref.dtype)


def prepare_params(w1_t, b1, w2_t, b2):
    """One-time param prep (hoisted out of the per-call path): bf16 weights,
    f32 biases, hidden dim lane-padded to a multiple of 128."""
    H = w2_t.shape[1]
    H_pad = _round_up(H, 128)
    w1_bf = w1_t.astype(jnp.bfloat16)
    w2_bf = w2_t.astype(jnp.bfloat16)
    b1_f = b1.reshape(1, -1).astype(jnp.float32)
    b2_f = b2.reshape(1, -1).astype(jnp.float32)
    if H_pad != H:
        w2_bf = jnp.pad(w2_bf, ((0, 0), (0, H_pad - H)))
        b2_f = jnp.pad(b2_f, ((0, 0), (0, H_pad - H)))
    return (w1_bf, b1_f, w2_bf, b2_f, H)


def finger_encoder(x, params, *, tm=1024, out_dtype=jnp.float32):
    """Eval-mode forward of FingerEncoder.

    x: (B, 1024) float array (kept in its native dtype; cast in-kernel).
    params: output of prepare_params(...) (call it ONCE, outside the hot loop).
    Returns (B, hidden_dim) array of out_dtype.
    """
    w1_bf, b1_f, w2_bf, b2_f, H = params
    B = x.shape[0]
    H_pad = w2_bf.shape[1]

    # Batch tile:
    #  * small batches: round to 16 rows (bf16 intermediate packing granule);
    #    the ragged block is handled by Pallas boundary masking (no jnp.pad).
    #  * large batches: big tiles amortize per-step overhead, but keep >= 2 grid
    #    steps so v7x's second TensorCore gets work (batch axis is "parallel").
    tm = max(16, min(tm, _round_up(B, 16)))
    if B >= 512:
        tm = min(tm, _round_up(pl.cdiv(B, 2), 256))

    grid = (pl.cdiv(B, tm),)

    out_bytes = 2 if out_dtype == jnp.bfloat16 else 4
    cost = pl.CostEstimate(
        flops=2 * B * NUM_FEATURES * HIDDEN_LSTM + 2 * B * HIDDEN_LSTM * H_pad,
        transcendentals=0,
        bytes_accessed=(x.size * x.dtype.itemsize
                        + w1_bf.size * 2 + w2_bf.size * 2
                        + b1_f.size * 4 + b2_f.size * 4
                        + B * H_pad * out_bytes),
    )

    out = pl.pallas_call(
        finger_encoder_kernel,
        out_shape=jax.ShapeDtypeStruct((B, H_pad), out_dtype),
        grid=grid,
        in_specs=[
            pl.BlockSpec((tm, NUM_FEATURES), lambda i: (i, 0)),           # x streams
            pl.BlockSpec((NUM_FEATURES, HIDDEN_LSTM), lambda i: (0, 0)),  # w1 resident
            pl.BlockSpec((1, HIDDEN_LSTM), lambda i: (0, 0)),             # b1 resident
            pl.BlockSpec((HIDDEN_LSTM, H_pad), lambda i: (0, 0)),         # w2 resident
            pl.BlockSpec((1, H_pad), lambda i: (0, 0)),                   # b2 resident
        ],
        out_specs=pl.BlockSpec((tm, H_pad), lambda i: (i, 0)),
        compiler_params=pltpu.CompilerParams(
            dimension_semantics=("parallel",),
            vmem_limit_bytes=32 << 20,   # ~15 MiB footprint at tm=1024; headroom
        ),
        cost_estimate=cost,
    )(x, w1_bf, b1_f, w2_bf, b2_f)

    if H_pad != H:
        out = out[:, :H]
    return out


def init_params(key, hidden_dim):
    """Deterministic init mimicking torch.nn.Linear default (U[-1/sqrt(fan_in), +1/sqrt(fan_in)])."""
    k1, k2, k3, k4 = jax.random.split(key, 4)
    bound1 = 1.0 / jnp.sqrt(NUM_FEATURES)
    bound2 = 1.0 / jnp.sqrt(HIDDEN_LSTM)
    # Stored directly in transposed (in, out) layout for the kernel.
    w1_t = jax.random.uniform(k1, (NUM_FEATURES, HIDDEN_LSTM), jnp.float32,
                              -bound1, bound1)
    b1 = jax.random.uniform(k2, (1, HIDDEN_LSTM), jnp.float32, -bound1, bound1)
    w2_t = jax.random.uniform(k3, (HIDDEN_LSTM, hidden_dim), jnp.float32,
                              -bound2, bound2)
    b2 = jax.random.uniform(k4, (1, hidden_dim), jnp.float32, -bound2, bound2)
    return w1_t, b1, w2_t, b2


if __name__ == "__main__":
    key = jax.random.PRNGKey(0)
    k_in, k_param = jax.random.split(key)

    batch = 8
    hidden_dim = 128

    # ECFP fingerprints are binary bit-vectors.
    ecfp = (jax.random.uniform(k_in, (batch, NUM_FEATURES), jnp.float32)
            > 0.5).astype(jnp.float32)
    w1_t, b1, w2_t, b2 = init_params(k_param, hidden_dim)

    # Param prep done ONCE (hoisted out of the per-call path).
    params = prepare_params(w1_t, b1, w2_t, b2)

    out = finger_encoder(ecfp, params)
    out = jax.block_until_ready(out)

    # Reference in plain JAX, mimicking the kernel's bf16 matmul / f32 accumulate path.
    xb = ecfp.astype(jnp.bfloat16).astype(jnp.float32)
    w1f = w1_t.astype(jnp.bfloat16).astype(jnp.float32)
    w2f = w2_t.astype(jnp.bfloat16).astype(jnp.float32)
    h_ref = jnp.maximum(xb @ w1f + b1, 0.0)
    h_ref = h_ref.astype(jnp.bfloat16).astype(jnp.float32)
    ref = h_ref @ w2f + b2

    assert out.shape == (batch, hidden_dim)
    assert jnp.allclose(out, ref, atol=2e-3, rtol=2e-3), (
        float(jnp.max(jnp.abs(out - ref))))

    print("KERNEL_OK")
</pallas_src>

<mosaic_0001>
module attributes {stable_mosaic.version = 11 : i64} {
  func.func @finger_encoder_kernel(%arg0: i32, %arg1: memref<16x1024xf32, #tpu.memory_space<vmem>>, %arg2: memref<1024x512xbf16, #tpu.memory_space<vmem>>, %arg3: memref<1x512xf32, #tpu.memory_space<vmem>>, %arg4: memref<512x128xbf16, #tpu.memory_space<vmem>>, %arg5: memref<1x128xf32, #tpu.memory_space<vmem>>, %arg6: memref<16x128xf32, #tpu.memory_space<vmem>>) attributes {dimension_semantics = [#tpu.dimension_semantics<parallel>], iteration_bounds = array<i64: 1>, scalar_prefetch = 0 : i64, scratch_operands = 0 : i64, tpu.core_type = #tpu.core_type<tc>, window_params = [{transform_indices = @transform_0, window_bounds = array<i64: 16, 1024>}, {pipeline_mode = #tpu.pipeline_mode<synchronous>, transform_indices = @transform_1, window_bounds = array<i64: 1024, 512>}, {pipeline_mode = #tpu.pipeline_mode<synchronous>, transform_indices = @transform_2, window_bounds = array<i64: 1, 512>}, {pipeline_mode = #tpu.pipeline_mode<synchronous>, transform_indices = @transform_3, window_bounds = array<i64: 512, 128>}, {pipeline_mode = #tpu.pipeline_mode<synchronous>, transform_indices = @transform_4, window_bounds = array<i64: 1, 128>}, {transform_indices = @transform_5, window_bounds = array<i64: 16, 128>}]} {
    %c0 = arith.constant 0 : index
    %c0_0 = arith.constant 0 : index
    %0 = vector.load %arg1[%c0, %c0_0] : memref<16x1024xf32, #tpu.memory_space<vmem>>, vector<16x1024xf32>
    %1 = arith.truncf %0 : vector<16x1024xf32> to vector<16x1024xbf16>
    %c0_1 = arith.constant 0 : index
    %c0_2 = arith.constant 0 : index
    %2 = vector.load %arg2[%c0_1, %c0_2] : memref<1024x512xbf16, #tpu.memory_space<vmem>>, vector<1024x512xbf16>
    %cst = arith.constant dense<0.000000e+00> : vector<16x512xf32>
    %3 = tpu.matmul %1, %2, %cst {dimension_numbers = #tpu.dot_dimension_numbers<[1], [0], [0], [1], [0, 0, 1, 1], [], []>} : vector<16x1024xbf16>, vector<1024x512xbf16>, vector<16x512xf32> -> vector<16x512xf32>
    %c0_3 = arith.constant 0 : index
    %c0_4 = arith.constant 0 : index
    %4 = vector.load %arg3[%c0_3, %c0_4] : memref<1x512xf32, #tpu.memory_space<vmem>>, vector<1x512xf32>
    %5 = vector.broadcast %4 : vector<1x512xf32> to vector<16x512xf32>
    %6 = arith.addf %3, %5 : vector<16x512xf32>
    %cst_5 = arith.constant 0.000000e+00 : f32
    %7 = vector.broadcast %cst_5 : f32 to vector<16x512xf32>
    %8 = arith.maximumf %6, %7 : vector<16x512xf32>
    %9 = arith.truncf %8 : vector<16x512xf32> to vector<16x512xbf16>
    %c0_6 = arith.constant 0 : index
    %c0_7 = arith.constant 0 : index
    %10 = vector.load %arg4[%c0_6, %c0_7] : memref<512x128xbf16, #tpu.memory_space<vmem>>, vector<512x128xbf16>
    %cst_8 = arith.constant dense<0.000000e+00> : vector<16x128xf32>
    %11 = tpu.matmul %9, %10, %cst_8 {dimension_numbers = #tpu.dot_dimension_numbers<[1], [0], [0], [1], [0, 0, 1, 1], [], []>} : vector<16x512xbf16>, vector<512x128xbf16>, vector<16x128xf32> -> vector<16x128xf32>
    %c0_9 = arith.constant 0 : index
    %c0_10 = arith.constant 0 : index
    %12 = vector.load %arg5[%c0_9, %c0_10] : memref<1x128xf32, #tpu.memory_space<vmem>>, vector<1x128xf32>
    %13 = vector.broadcast %12 : vector<1x128xf32> to vector<16x128xf32>
    %14 = arith.addf %11, %13 : vector<16x128xf32>
    %c0_11 = arith.constant 0 : index
    %c0_12 = arith.constant 0 : index
    %15 = vector.load %arg6[%c0_11, %c0_12] : memref<16x128xf32, #tpu.memory_space<vmem>>, vector<16x128xf32>
    tpu.vector_store %arg6[%c0_11, %c0_12], %14 {strides = array<i32>} : memref<16x128xf32, #tpu.memory_space<vmem>>, vector<16x128xf32>,
    return
  }
  func.func @transform_0(%arg0: i32) -> (i32, i32) {
    %c0_i32 = arith.constant 0 : i32
    %c0_i32_0 = arith.constant 0 : i32
    return %arg0, %c0_i32 : i32, i32
  }
  func.func @transform_1(%arg0: i32) -> (i32, i32) {
    %c0_i32 = arith.constant 0 : i32
    %c0_i32_0 = arith.constant 0 : i32
    %c0_i32_1 = arith.constant 0 : i32
    return %c0_i32, %c0_i32_0 : i32, i32
  }
  func.func @transform_2(%arg0: i32) -> (i32, i32) {
    %c0_i32 = arith.constant 0 : i32
    %c0_i32_0 = arith.constant 0 : i32
    %c0_i32_1 = arith.constant 0 : i32
    return %c0_i32, %c0_i32_0 : i32, i32
  }
  func.func @transform_3(%arg0: i32) -> (i32, i32) {
    %c0_i32 = arith.constant 0 : i32
    %c0_i32_0 = arith.constant 0 : i32
    %c0_i32_1 = arith.constant 0 : i32
    return %c0_i32, %c0_i32_0 : i32, i32
  }
  func.func @transform_4(%arg0: i32) -> (i32, i32) {
    %c0_i32 = arith.constant 0 : i32
    %c0_i32_0 = arith.constant 0 : i32
    %c0_i32_1 = arith.constant 0 : i32
    return %c0_i32, %c0_i32_0 : i32, i32
  }
  func.func @transform_5(%arg0: i32) -> (i32, i32) {
    %c0_i32 = arith.constant 0 : i32
    %c0_i32_0 = arith.constant 0 : i32
    return %arg0, %c0_i32 : i32, i32
  }
}

</mosaic_0001>

<llo_original>
// kernel: tpu_custom_call.1
$region0: #{tpu_custom_call.1}
  #allocation0 [shape = 'u32[]', space=smem, size = 0x4, offset = 0x4, fixed_abs, tag = 'smem constant byte address 0x4 - core index']
  #allocation1 [shape = 'u32[144,128]{1,0:T(1,128)}', space=vmem, size = 0x12000, scoped, tag = 'internal scratch']
  %s0 = inlined_call_operand.hbm [shape: f32[8,1024], index: 0, kind: input, shape index: {}]
  %s1 = inlined_call_operand.hbm [shape: bf16[1024,512], index: 1, kind: input, shape index: {}]
  %s2 = inlined_call_operand.hbm [shape: f32[1,512], index: 2, kind: input, shape index: {}]
  %s3 = inlined_call_operand.hbm [shape: bf16[512,128], index: 3, kind: input, shape index: {}]
  %s4 = inlined_call_operand.vmem [shape: f32[1,128], index: 4, kind: input, shape index: {}]
  %s5 = inlined_call_operand.hbm [shape: f32[8,128], index: 5, kind: output, shape index: {}]
  %s6 = sld [smem:[#allocation0]]
  $region46: #{tpu_custom_call.1} parent=0
    _
  %s8 = ssub.s32 1, %s6
  %s9 = scalar_select 0, %s8, %s6
  $region1: #{tpu_custom_call.1} parent=0
    #allocation2 [shape = 'u8[65536]{0}', space=vmem, size = 0x10000, scoped, tag = 'input window, operand 0, single buffered']
    #allocation3 [shape = 's32[1]{0}', space=sflag, size = 0x4, scoped, tag = 'scoped memory for tpu_custom_call.1']
    #allocation4 [shape = 's32[1]{0}', space=sflag, size = 0x4, scoped, tag = 'scoped memory for tpu_custom_call.1']
    #allocation5 [shape = 'u8[1048576]{0}', space=vmem, size = 0x100000, scoped, tag = 'input window, operand 1, single buffered']
    #allocation6 [shape = 's32[1]{0}', space=sflag, size = 0x4, scoped, tag = 'scoped memory for tpu_custom_call.1']
    #allocation7 [shape = 'u8[2048]{0}', space=vmem, size = 0x800, scoped, tag = 'input window, operand 2, single buffered']
    #allocation8 [shape = 'u8[131072]{0}', space=vmem, size = 0x20000, scoped, tag = 'input window, operand 3, single buffered']
    #allocation9 [shape = 's32[1]{0}', space=sflag, size = 0x4, scoped, tag = 'scoped memory for tpu_custom_call.1']
    #allocation10 [shape = 'u8[8192]{0}', space=vmem, size = 0x2000, scoped, tag = 'output window, operand 0, single buffered']
    %10 = vsyncpa [#allocation3], 0
    %11 = vsyncpa [#allocation6], 0
    %12 = vsyncpa [#allocation9], 0
    %13 = vsyncpa [#allocation4], 0
    // Predicated region
    $region2: #{tpu_custom_call.1} parent=1 // pred_check
      _
    $region3: #{tpu_custom_call.1} parent=1 // pred_check_branch
      %15 = sbr.rel (0) target = $region5
    $region4: #{tpu_custom_call.1} parent=1 // pred_region
      %s17 = ssub.s32 2048, 1024
      %18 = vsyncadd [#allocation3], %s17
      %s19 = sshll.u32 [#allocation2], 4
      %s20 = int_to_ptr.vmem [resolvable:$true] %s19
      %25 = dma.hbm_to_vmem [thread:$0]  %s0, 1024, %s20, [#allocation3], 1024, 1024, 64
    $region5: #{tpu_custom_call.1} parent=1 // pred_fallthru
      _
    // Predicated region
    $region6: #{tpu_custom_call.1} parent=1 // pred_check
      _
    $region7: #{tpu_custom_call.1} parent=1 // pred_check_branch
      %27 = sbr.rel (0) target = $region9
    $region8: #{tpu_custom_call.1} parent=1 // pred_region
      %s29 = ssub.s32 32768, 32768
      %30 = vsyncadd [#allocation6], %s29
      %s31 = sshll.u32 [#allocation5], 4
      %s32 = int_to_ptr.vmem [resolvable:$true] %s31
      %37 = dma.hbm_to_vmem [thread:$0]  %s1, 32768, %s32, [#allocation6], 256, 256, 16
    $region9: #{tpu_custom_call.1} parent=1 // pred_fallthru
      _
    // Predicated region
    $region10: #{tpu_custom_call.1} parent=1 // pred_check
      _
    $region11: #{tpu_custom_call.1} parent=1 // pred_check_branch
      %39 = sbr.rel (0) target = $region13
    $region12: #{tpu_custom_call.1} parent=1 // pred_region
      %s41 = ssub.s32 64, 64
      %42 = vsyncadd [#allocation6], %s41
      %s44 = sshll.u32 [#allocation7], 4
      %s45 = int_to_ptr.vmem [resolvable:$true] %s44
      %47 = dma.hbm_to_vmem [thread:$0]  %s2, 64, %s45, [#allocation6]
    $region13: #{tpu_custom_call.1} parent=1 // pred_fallthru
      _
    // Predicated region
    $region14: #{tpu_custom_call.1} parent=1 // pred_check
      _
    $region15: #{tpu_custom_call.1} parent=1 // pred_check_branch
      %49 = sbr.rel (0) target = $region17
    $region16: #{tpu_custom_call.1} parent=1 // pred_region
      %s51 = ssub.s32 4096, 4096
      %52 = vsyncadd [#allocation9], %s51
      %s53 = sshll.u32 [#allocation8], 4
      %s54 = int_to_ptr.vmem [resolvable:$true] %s53
      %59 = dma.hbm_to_vmem [thread:$0]  %s3, 4096, %s54, [#allocation9], 64, 64, 4
    $region17: #{tpu_custom_call.1} parent=1 // pred_fallthru
      _
    // Predicated region
    $region18: #{tpu_custom_call.1} parent=1 // pred_check
      _
    $region19: #{tpu_custom_call.1} parent=1 // pred_check_branch
      %61 = sbr.rel (0) target = $region21
    $region20: #{tpu_custom_call.1} parent=1 // pred_region
      _
    $region21: #{tpu_custom_call.1} parent=1 // pred_fallthru
      _
    // Predicated region
    $region22: #{tpu_custom_call.1} parent=1 // pred_check
      _
    $region23: #{tpu_custom_call.1} parent=1 // pred_check_branch
      %63 = sbr.rel (0) target = $region25
    $region24: #{tpu_custom_call.1} parent=1 // pred_region
      %64 = dma.done [#allocation3], 2048
    $region25: #{tpu_custom_call.1} parent=1 // pred_fallthru
      _
    // Predicated region
    $region26: #{tpu_custom_call.1} parent=1 // pred_check
      _
    $region27: #{tpu_custom_call.1} parent=1 // pred_check_branch
      %66 = sbr.rel (0) target = $region29
    $region28: #{tpu_custom_call.1} parent=1 // pred_region
      %67 = dma.done [#allocation6], 32768
    $region29: #{tpu_custom_call.1} parent=1 // pred_fallthru
      _
    // Predicated region
    $region30: #{tpu_custom_call.1} parent=1 // pred_check
      _
    $region31: #{tpu_custom_call.1} parent=1 // pred_check_branch
      %69 = sbr.rel (0) target = $region33
    $region32: #{tpu_custom_call.1} parent=1 // pred_region
      %70 = dma.done [#allocation6], 64
    $region33: #{tpu_custom_call.1} parent=1 // pred_fallthru
      _
    // Predicated region
    $region34: #{tpu_custom_call.1} parent=1 // pred_check
      _
    $region35: #{tpu_custom_call.1} parent=1 // pred_check_branch
      %72 = sbr.rel (0) target = $region37
    $region36: #{tpu_custom_call.1} parent=1 // pred_region
      %73 = dma.done [#allocation9], 4096
    $region37: #{tpu_custom_call.1} parent=1 // pred_fallthru
      _
    %v75 = vld [vmem:[#allocation2] sm:$0xff]
    %v76 = vld [vmem:[#allocation2 + $0x8] sm:$0xff]
    %v77 = vld [vmem:[#allocation2 + $0x10] sm:$0xff]
    %v78 = vld [vmem:[#allocation2 + $0x18] sm:$0xff]
    %v79 = vld [vmem:[#allocation2 + $0x20] sm:$0xff]
    %v80 = vld [vmem:[#allocation2 + $0x28] sm:$0xff]
    %v81 = vld [vmem:[#allocation2 + $0x30] sm:$0xff]
    %v82 = vld [vmem:[#allocation2 + $0x38] sm:$0xff]
    %v83 = vld [vmem:[#allocation2 + $0x40] sm:$0xff]
    %v84 = vld [vmem:[#allocation2 + $0x48] sm:$0xff]
    %v85 = vld [vmem:[#allocation2 + $0x50] sm:$0xff]
    %v86 = vld [vmem:[#allocation2 + $0x58] sm:$0xff]
    %v87 = vld [vmem:[#allocation2 + $0x60] sm:$0xff]
    %v88 = vld [vmem:[#allocation2 + $0x68] sm:$0xff]
    %v89 = vld [vmem:[#allocation2 + $0x70] sm:$0xff]
    %v90 = vld [vmem:[#allocation2 + $0x78] sm:$0xff]
    %v91 = vpack.c.bf16 %v83, %v75
    %v92 = vpack.c.bf16 %v84, %v76
    %v93 = vpack.c.bf16 %v85, %v77
    %v94 = vpack.c.bf16 %v86, %v78
    %v95 = vpack.c.bf16 %v87, %v79
    %v96 = vpack.c.bf16 %v88, %v80
    %v97 = vpack.c.bf16 %v89, %v81
    %v98 = vpack.c.bf16 %v90, %v82
    %v99 = vld [vmem:[#allocation5] sm:$0xff]
    %v100 = vld [vmem:[#allocation5 + $0x8] sm:$0xff]
    %v101 = vld [vmem:[#allocation5 + $0x10] sm:$0xff]
    %v102 = vld [vmem:[#allocation5 + $0x18] sm:$0xff]
    %v103 = vld [vmem:[#allocation5 + $0x20] sm:$0xff]
    %v104 = vld [vmem:[#allocation5 + $0x28] sm:$0xff]
    %v105 = vld [vmem:[#allocation5 + $0x30] sm:$0xff]
    %v106 = vld [vmem:[#allocation5 + $0x38] sm:$0xff]
    %v107 = vld [vmem:[#allocation5 + $0x40] sm:$0xff]
    %v108 = vld [vmem:[#allocation5 + $0x48] sm:$0xff]
    %v109 = vld [vmem:[#allocation5 + $0x50] sm:$0xff]
    %v110 = vld [vmem:[#allocation5 + $0x58] sm:$0xff]
    %v111 = vld [vmem:[#allocation5 + $0x60] sm:$0xff]
    %v112 = vld [vmem:[#allocation5 + $0x68] sm:$0xff]
    %v113 = vld [vmem:[#allocation5 + $0x70] sm:$0xff]
    %v114 = vld [vmem:[#allocation5 + $0x78] sm:$0xff]
    %v115 = vld [vmem:[#allocation5 + $0x80] sm:$0xff]
    %v116 = vld [vmem:[#allocation5 + $0x88] sm:$0xff]
    %v117 = vld [vmem:[#allocation5 + $0x90] sm:$0xff]
    %v118 = vld [vmem:[#allocation5 + $0x98] sm:$0xff]
    %v119 = vld [vmem:[#allocation5 + $0xa0] sm:$0xff]
    %v120 = vld [vmem:[#allocation5 + $0xa8] sm:$0xff]
    %v121 = vld [vmem:[#allocation5 + $0xb0] sm:$0xff]
    %v122 = vld [vmem:[#allocation5 + $0xb8] sm:$0xff]
    %v123 = vld [vmem:[#allocation5 + $0xc0] sm:$0xff]
    %v124 = vld [vmem:[#allocation5 + $0xc8] sm:$0xff]
    %v125 = vld [vmem:[#allocation5 + $0xd0] sm:$0xff]
    %v126 = vld [vmem:[#allocation5 + $0xd8] sm:$0xff]
    %v127 = vld [vmem:[#allocation5 + $0xe0] sm:$0xff]
    %v128 = vld [vmem:[#allocation5 + $0xe8] sm:$0xff]
    %v129 = vld [vmem:[#allocation5 + $0xf0] sm:$0xff]
    %v130 = vld [vmem:[#allocation5 + $0xf8] sm:$0xff]
    %v131 = vld [vmem:[#allocation5 + $0x100] sm:$0xff]
    %v132 = vld [vmem:[#allocation5 + $0x108] sm:$0xff]
    %v133 = vld [vmem:[#allocation5 + $0x110] sm:$0xff]
    %v134 = vld [vmem:[#allocation5 + $0x118] sm:$0xff]
    %v135 = vld [vmem:[#allocation5 + $0x120] sm:$0xff]
    %v136 = vld [vmem:[#allocation5 + $0x128] sm:$0xff]
    %v137 = vld [vmem:[#allocation5 + $0x130] sm:$0xff]
    %v138 = vld [vmem:[#allocation5 + $0x138] sm:$0xff]
    %v139 = vld [vmem:[#allocation5 + $0x140] sm:$0xff]
    %v140 = vld [vmem:[#allocation5 + $0x148] sm:$0xff]
    %v141 = vld [vmem:[#allocation5 + $0x150] sm:$0xff]
    %v142 = vld [vmem:[#allocation5 + $0x158] sm:$0xff]
    %v143 = vld [vmem:[#allocation5 + $0x160] sm:$0xff]
    %v144 = vld [vmem:[#allocation5 + $0x168] sm:$0xff]
    %v145 = vld [vmem:[#allocation5 + $0x170] sm:$0xff]
    %v146 = vld [vmem:[#allocation5 + $0x178] sm:$0xff]
    %v147 = vld [vmem:[#allocation5 + $0x180] sm:$0xff]
    %v148 = vld [vmem:[#allocation5 + $0x188] sm:$0xff]
    %v149 = vld [vmem:[#allocation5 + $0x190] sm:$0xff]
    %v150 = vld [vmem:[#allocation5 + $0x198] sm:$0xff]
    %v151 = vld [vmem:[#allocation5 + $0x1a0] sm:$0xff]
    %v152 = vld [vmem:[#allocation5 + $0x1a8] sm:$0xff]
    %v153 = vld [vmem:[#allocation5 + $0x1b0] sm:$0xff]
    %v154 = vld [vmem:[#allocation5 + $0x1b8] sm:$0xff]
    %v155 = vld [vmem:[#allocation5 + $0x1c0] sm:$0xff]
    %v156 = vld [vmem:[#allocation5 + $0x1c8] sm:$0xff]
    %v157 = vld [vmem:[#allocation5 + $0x1d0] sm:$0xff]
    %v158 = vld [vmem:[#allocation5 + $0x1d8] sm:$0xff]
    %v159 = vld [vmem:[#allocation5 + $0x1e0] sm:$0xff]
    %v160 = vld [vmem:[#allocation5 + $0x1e8] sm:$0xff]
    %v161 = vld [vmem:[#allocation5 + $0x1f0] sm:$0xff]
    %v162 = vld [vmem:[#allocation5 + $0x1f8] sm:$0xff]
    %v163 = vld [vmem:[#allocation5 + $0x200] sm:$0xff]
    %v164 = vld [vmem:[#allocation5 + $0x208] sm:$0xff]
    %v165 = vld [vmem:[#allocation5 + $0x210] sm:$0xff]
    %v166 = vld [vmem:[#allocation5 + $0x218] sm:$0xff]
    %v167 = vld [vmem:[#allocation5 + $0x220] sm:$0xff]
    %v168 = vld [vmem:[#allocation5 + $0x228] sm:$0xff]
    %v169 = vld [vmem:[#allocation5 + $0x230] sm:$0xff]
    %v170 = vld [vmem:[#allocation5 + $0x238] sm:$0xff]
    %v171 = vld [vmem:[#allocation5 + $0x240] sm:$0xff]
    %v172 = vld [vmem:[#allocation5 + $0x248] sm:$0xff]
    %v173 = vld [vmem:[#allocation5 + $0x250] sm:$0xff]
    %v174 = vld [vmem:[#allocation5 + $0x258] sm:$0xff]
    %v175 = vld [vmem:[#allocation5 + $0x260] sm:$0xff]
    %v176 = vld [vmem:[#allocation5 + $0x268] sm:$0xff]
    %v177 = vld [vmem:[#allocation5 + $0x270] sm:$0xff]
    %v178 = vld [vmem:[#allocation5 + $0x278] sm:$0xff]
    %v179 = vld [vmem:[#allocation5 + $0x280] sm:$0xff]
    %v180 = vld [vmem:[#allocation5 + $0x288] sm:$0xff]
    %v181 = vld [vmem:[#allocation5 + $0x290] sm:$0xff]
    %v182 = vld [vmem:[#allocation5 + $0x298] sm:$0xff]
    %v183 = vld [vmem:[#allocation5 + $0x2a0] sm:$0xff]
    %v184 = vld [vmem:[#allocation5 + $0x2a8] sm:$0xff]
    %v185 = vld [vmem:[#allocation5 + $0x2b0] sm:$0xff]
    %v186 = vld [vmem:[#allocation5 + $0x2b8] sm:$0xff]
    %v187 = vld [vmem:[#allocation5 + $0x2c0] sm:$0xff]
    %v188 = vld [vmem:[#allocation5 + $0x2c8] sm:$0xff]
    %v189 = vld [vmem:[#allocation5 + $0x2d0] sm:$0xff]
    %v190 = vld [vmem:[#allocation5 + $0x2d8] sm:$0xff]
    %v191 = vld [vmem:[#allocation5 + $0x2e0] sm:$0xff]
    %v192 = vld [vmem:[#allocation5 + $0x2e8] sm:$0xff]
    %v193 = vld [vmem:[#allocation5 + $0x2f0] sm:$0xff]
    %v194 = vld [vmem:[#allocation5 + $0x2f8] sm:$0xff]
    %v195 = vld [vmem:[#allocation5 + $0x300] sm:$0xff]
    %v196 = vld [vmem:[#allocation5 + $0x308] sm:$0xff]
    %v197 = vld [vmem:[#allocation5 + $0x310] sm:$0xff]
    %v198 = vld [vmem:[#allocation5 + $0x318] sm:$0xff]
    %v199 = vld [vmem:[#allocation5 + $0x320] sm:$0xff]
    %v200 = vld [vmem:[#allocation5 + $0x328] sm:$0xff]
    %v201 = vld [vmem:[#allocation5 + $0x330] sm:$0xff]
    %v202 = vld [vmem:[#allocation5 + $0x338] sm:$0xff]
    %v203 = vld [vmem:[#allocation5 + $0x340] sm:$0xff]
    %v204 = vld [vmem:[#allocation5 + $0x348] sm:$0xff]
    %v205 = vld [vmem:[#allocation5 + $0x350] sm:$0xff]
    %v206 = vld [vmem:[#allocation5 + $0x358] sm:$0xff]
    %v207 = vld [vmem:[#allocation5 + $0x360] sm:$0xff]
    %v208 = vld [vmem:[#allocation5 + $0x368] sm:$0xff]
    %v209 = vld [vmem:[#allocation5 + $0x370] sm:$0xff]
    %v210 = vld [vmem:[#allocation5 + $0x378] sm:$0xff]
    %v211 = vld [vmem:[#allocation5 + $0x380] sm:$0xff]
    %v212 = vld [vmem:[#allocation5 + $0x388] sm:$0xff]
    %v213 = vld [vmem:[#allocation5 + $0x390] sm:$0xff]
    %v214 = vld [vmem:[#allocation5 + $0x398] sm:$0xff]
    %v215 = vld [vmem:[#allocation5 + $0x3a0] sm:$0xff]
    %v216 = vld [vmem:[#allocation5 + $0x3a8] sm:$0xff]
    %v217 = vld [vmem:[#allocation5 + $0x3b0] sm:$0xff]
    %v218 = vld [vmem:[#allocation5 + $0x3b8] sm:$0xff]
    %v219 = vld [vmem:[#allocation5 + $0x3c0] sm:$0xff]
    %v220 = vld [vmem:[#allocation5 + $0x3c8] sm:$0xff]
    %v221 = vld [vmem:[#allocation5 + $0x3d0] sm:$0xff]
    %v222 = vld [vmem:[#allocation5 + $0x3d8] sm:$0xff]
    %v223 = vld [vmem:[#allocation5 + $0x3e0] sm:$0xff]
    %v224 = vld [vmem:[#allocation5 + $0x3e8] sm:$0xff]
    %v225 = vld [vmem:[#allocation5 + $0x3f0] sm:$0xff]
    %v226 = vld [vmem:[#allocation5 + $0x3f8] sm:$0xff]
    %v227 = vld [vmem:[#allocation5 + $0x400] sm:$0xff]
    %v228 = vld [vmem:[#allocation5 + $0x408] sm:$0xff]
    %v229 = vld [vmem:[#allocation5 + $0x410] sm:$0xff]
    %v230 = vld [vmem:[#allocation5 + $0x418] sm:$0xff]
    %v231 = vld [vmem:[#allocation5 + $0x420] sm:$0xff]
    %v232 = vld [vmem:[#allocation5 + $0x428] sm:$0xff]
    %v233 = vld [vmem:[#allocation5 + $0x430] sm:$0xff]
    %v234 = vld [vmem:[#allocation5 + $0x438] sm:$0xff]
    %v235 = vld [vmem:[#allocation5 + $0x440] sm:$0xff]
    %v236 = vld [vmem:[#allocation5 + $0x448] sm:$0xff]
    %v237 = vld [vmem:[#allocation5 + $0x450] sm:$0xff]
    %v238 = vld [vmem:[#allocation5 + $0x458] sm:$0xff]
    %v239 = vld [vmem:[#allocation5 + $0x460] sm:$0xff]
    %v240 = vld [vmem:[#allocation5 + $0x468] sm:$0xff]
    %v241 = vld [vmem:[#allocation5 + $0x470] sm:$0xff]
    %v242 = vld [vmem:[#allocation5 + $0x478] sm:$0xff]
    %v243 = vld [vmem:[#allocation5 + $0x480] sm:$0xff]
    %v244 = vld [vmem:[#allocation5 + $0x488] sm:$0xff]
    %v245 = vld [vmem:[#allocation5 + $0x490] sm:$0xff]
    %v246 = vld [vmem:[#allocation5 + $0x498] sm:$0xff]
    %v247 = vld [vmem:[#allocation5 + $0x4a0] sm:$0xff]
    %v248 = vld [vmem:[#allocation5 + $0x4a8] sm:$0xff]
    %v249 = vld [vmem:[#allocation5 + $0x4b0] sm:$0xff]
    %v250 = vld [vmem:[#allocation5 + $0x4b8] sm:$0xff]
    %v251 = vld [vmem:[#allocation5 + $0x4c0] sm:$0xff]
    %v252 = vld [vmem:[#allocation5 + $0x4c8] sm:$0xff]
    %v253 = vld [vmem:[#allocation5 + $0x4d0] sm:$0xff]
    %v254 = vld [vmem:[#allocation5 + $0x4d8] sm:$0xff]
    %v255 = vld [vmem:[#allocation5 + $0x4e0] sm:$0xff]
    %v256 = vld [vmem:[#allocation5 + $0x4e8] sm:$0xff]
    %v257 = vld [vmem:[#allocation5 + $0x4f0] sm:$0xff]
    %v258 = vld [vmem:[#allocation5 + $0x4f8] sm:$0xff]
    %v259 = vld [vmem:[#allocation5 + $0x500] sm:$0xff]
    %v260 = vld [vmem:[#allocation5 + $0x508] sm:$0xff]
    %v261 = vld [vmem:[#allocation5 + $0x510] sm:$0xff]
    %v262 = vld [vmem:[#allocation5 + $0x518] sm:$0xff]
    %v263 = vld [vmem:[#allocation5 + $0x520] sm:$0xff]
    %v264 = vld [vmem:[#allocation5 + $0x528] sm:$0xff]
    %v265 = vld [vmem:[#allocation5 + $0x530] sm:$0xff]
    %v266 = vld [vmem:[#allocation5 + $0x538] sm:$0xff]
    %v267 = vld [vmem:[#allocation5 + $0x540] sm:$0xff]
    %v268 = vld [vmem:[#allocation5 + $0x548] sm:$0xff]
    %v269 = vld [vmem:[#allocation5 + $0x550] sm:$0xff]
    %v270 = vld [vmem:[#allocation5 + $0x558] sm:$0xff]
    %v271 = vld [vmem:[#allocation5 + $0x560] sm:$0xff]
    %v272 = vld [vmem:[#allocation5 + $0x568] sm:$0xff]
    %v273 = vld [vmem:[#allocation5 + $0x570] sm:$0xff]
    %v274 = vld [vmem:[#allocation5 + $0x578] sm:$0xff]
    %v275 = vld [vmem:[#allocation5 + $0x580] sm:$0xff]
    %v276 = vld [vmem:[#allocation5 + $0x588] sm:$0xff]
    %v277 = vld [vmem:[#allocation5 + $0x590] sm:$0xff]
    %v278 = vld [vmem:[#allocation5 + $0x598] sm:$0xff]
    %v279 = vld [vmem:[#allocation5 + $0x5a0] sm:$0xff]
    %v280 = vld [vmem:[#allocation5 + $0x5a8] sm:$0xff]
    %v281 = vld [vmem:[#allocation5 + $0x5b0] sm:$0xff]
    %v282 = vld [vmem:[#allocation5 + $0x5b8] sm:$0xff]
    %v283 = vld [vmem:[#allocation5 + $0x5c0] sm:$0xff]
    %v284 = vld [vmem:[#allocation5 + $0x5c8] sm:$0xff]
    %v285 = vld [vmem:[#allocation5 + $0x5d0] sm:$0xff]
    %v286 = vld [vmem:[#allocation5 + $0x5d8] sm:$0xff]
    %v287 = vld [vmem:[#allocation5 + $0x5e0] sm:$0xff]
    %v288 = vld [vmem:[#allocation5 + $0x5e8] sm:$0xff]
    %v289 = vld [vmem:[#allocation5 + $0x5f0] sm:$0xff]
    %v290 = vld [vmem:[#allocation5 + $0x5f8] sm:$0xff]
    %v291 = vld [vmem:[#allocation5 + $0x600] sm:$0xff]
    %v292 = vld [vmem:[#allocation5 + $0x608] sm:$0xff]
    %v293 = vld [vmem:[#allocation5 + $0x610] sm:$0xff]
    %v294 = vld [vmem:[#allocation5 + $0x618] sm:$0xff]
    %v295 = vld [vmem:[#allocation5 + $0x620] sm:$0xff]
    %v296 = vld [vmem:[#allocation5 + $0x628] sm:$0xff]
    %v297 = vld [vmem:[#allocation5 + $0x630] sm:$0xff]
    %v298 = vld [vmem:[#allocation5 + $0x638] sm:$0xff]
    %v299 = vld [vmem:[#allocation5 + $0x640] sm:$0xff]
    %v300 = vld [vmem:[#allocation5 + $0x648] sm:$0xff]
    %v301 = vld [vmem:[#allocation5 + $0x650] sm:$0xff]
    %v302 = vld [vmem:[#allocation5 + $0x658] sm:$0xff]
    %v303 = vld [vmem:[#allocation5 + $0x660] sm:$0xff]
    %v304 = vld [vmem:[#allocation5 + $0x668] sm:$0xff]
    %v305 = vld [vmem:[#allocation5 + $0x670] sm:$0xff]
    %v306 = vld [vmem:[#allocation5 + $0x678] sm:$0xff]
    %v307 = vld [vmem:[#allocation5 + $0x680] sm:$0xff]
    %v308 = vld [vmem:[#allocation5 + $0x688] sm:$0xff]
    %v309 = vld [vmem:[#allocation5 + $0x690] sm:$0xff]
    %v310 = vld [vmem:[#allocation5 + $0x698] sm:$0xff]
    %v311 = vld [vmem:[#allocation5 + $0x6a0] sm:$0xff]
    %v312 = vld [vmem:[#allocation5 + $0x6a8] sm:$0xff]
    %v313 = vld [vmem:[#allocation5 + $0x6b0] sm:$0xff]
    %v314 = vld [vmem:[#allocation5 + $0x6b8] sm:$0xff]
    %v315 = vld [vmem:[#allocation5 + $0x6c0] sm:$0xff]
    %v316 = vld [vmem:[#allocation5 + $0x6c8] sm:$0xff]
    %v317 = vld [vmem:[#allocation5 + $0x6d0] sm:$0xff]
    %v318 = vld [vmem:[#allocation5 + $0x6d8] sm:$0xff]
    %v319 = vld [vmem:[#allocation5 + $0x6e0] sm:$0xff]
    %v320 = vld [vmem:[#allocation5 + $0x6e8] sm:$0xff]
    %v321 = vld [vmem:[#allocation5 + $0x6f0] sm:$0xff]
    %v322 = vld [vmem:[#allocation5 + $0x6f8] sm:$0xff]
    %v323 = vld [vmem:[#allocation5 + $0x700] sm:$0xff]
    %v324 = vld [vmem:[#allocation5 + $0x708] sm:$0xff]
    %v325 = vld [vmem:[#allocation5 + $0x710] sm:$0xff]
    %v326 = vld [vmem:[#allocation5 + $0x718] sm:$0xff]
    %v327 = vld [vmem:[#allocation5 + $0x720] sm:$0xff]
    %v328 = vld [vmem:[#allocation5 + $0x728] sm:$0xff]
    %v329 = vld [vmem:[#allocation5 + $0x730] sm:$0xff]
    %v330 = vld [vmem:[#allocation5 + $0x738] sm:$0xff]
    %v331 = vld [vmem:[#allocation5 + $0x740] sm:$0xff]
    %v332 = vld [vmem:[#allocation5 + $0x748] sm:$0xff]
    %v333 = vld [vmem:[#allocation5 + $0x750] sm:$0xff]
    %v334 = vld [vmem:[#allocation5 + $0x758] sm:$0xff]
    %v335 = vld [vmem:[#allocation5 + $0x760] sm:$0xff]
    %v336 = vld [vmem:[#allocation5 + $0x768] sm:$0xff]
    %v337 = vld [vmem:[#allocation5 + $0x770] sm:$0xff]
    %v338 = vld [vmem:[#allocation5 + $0x778] sm:$0xff]
    %v339 = vld [vmem:[#allocation5 + $0x780] sm:$0xff]
    %v340 = vld [vmem:[#allocation5 + $0x788] sm:$0xff]
    %v341 = vld [vmem:[#allocation5 + $0x790] sm:$0xff]
    %v342 = vld [vmem:[#allocation5 + $0x798] sm:$0xff]
    %v343 = vld [vmem:[#allocation5 + $0x7a0] sm:$0xff]
    %v344 = vld [vmem:[#allocation5 + $0x7a8] sm:$0xff]
    %v345 = vld [vmem:[#allocation5 + $0x7b0] sm:$0xff]
    %v346 = vld [vmem:[#allocation5 + $0x7b8] sm:$0xff]
    %v347 = vld [vmem:[#allocation5 + $0x7c0] sm:$0xff]
    %v348 = vld [vmem:[#allocation5 + $0x7c8] sm:$0xff]
    %v349 = vld [vmem:[#allocation5 + $0x7d0] sm:$0xff]
    %v350 = vld [vmem:[#allocation5 + $0x7d8] sm:$0xff]
    %v351 = vld [vmem:[#allocation5 + $0x7e0] sm:$0xff]
    %v352 = vld [vmem:[#allocation5 + $0x7e8] sm:$0xff]
    %v353 = vld [vmem:[#allocation5 + $0x7f0] sm:$0xff]
    %v354 = vld [vmem:[#allocation5 + $0x7f8] sm:$0xff]
    %v355 = vld [vmem:[#allocation7] sm:$0xf]
    %v357 = vlaneseq
    %v358 = vshrl.u32 %v357, 7
    %v359 = vsub.s32 0, %v358
    %v360 = vrot.slane %v355, %v359
    %v361 = vlaneseq
    %v362 = vshrl.u32 %v361, 7
    %v363 = vsub.s32 1, %v362
    %v364 = vrot.slane %v355, %v363
    %v365 = vlaneseq
    %v366 = vshrl.u32 %v365, 7
    %v367 = vsub.s32 2, %v366
    %v368 = vrot.slane %v355, %v367
    %v369 = vlaneseq
    %v370 = vshrl.u32 %v369, 7
    %v371 = vsub.s32 3, %v370
    %v372 = vrot.slane %v355, %v371
    %v633 = vunpack.c.l.b16 %v99
    %v634 = vunpack.c.h.b16 %v99
    %v635 = vunpack.c.l.b16 %v100
    %v636 = vunpack.c.h.b16 %v100
    %v637 = vunpack.c.l.b16 %v101
    %v638 = vunpack.c.h.b16 %v101
    %v639 = vunpack.c.l.b16 %v102
    %v640 = vunpack.c.h.b16 %v102
    %v641 = vunpack.c.l.b16 %v103
    %v642 = vunpack.c.h.b16 %v103
    %v643 = vunpack.c.l.b16 %v104
    %v644 = vunpack.c.h.b16 %v104
    %v645 = vunpack.c.l.b16 %v105
    %v646 = vunpack.c.h.b16 %v105
    %v647 = vunpack.c.l.b16 %v106
    %v648 = vunpack.c.h.b16 %v106
    %v649 = vunpack.c.l.b16 %v107
    %v650 = vunpack.c.h.b16 %v107
    %v651 = vunpack.c.l.b16 %v108
    %v652 = vunpack.c.h.b16 %v108
    %v653 = vunpack.c.l.b16 %v109
    %v654 = vunpack.c.h.b16 %v109
    %v655 = vunpack.c.l.b16 %v110
    %v656 = vunpack.c.h.b16 %v110
    %v657 = vunpack.c.l.b16 %v111
    %v658 = vunpack.c.h.b16 %v111
    %v659 = vunpack.c.l.b16 %v112
    %v660 = vunpack.c.h.b16 %v112
    %v661 = vunpack.c.l.b16 %v113
    %v662 = vunpack.c.h.b16 %v113
    %v663 = vunpack.c.l.b16 %v114
    %v664 = vunpack.c.h.b16 %v114
    %v665 = vunpack.c.l.b16 %v115
    %v666 = vunpack.c.h.b16 %v115
    %v667 = vunpack.c.l.b16 %v116
    %v668 = vunpack.c.h.b16 %v116
    %v669 = vunpack.c.l.b16 %v117
    %v670 = vunpack.c.h.b16 %v117
    %v671 = vunpack.c.l.b16 %v118
    %v672 = vunpack.c.h.b16 %v118
    %v673 = vunpack.c.l.b16 %v119
    %v674 = vunpack.c.h.b16 %v119
    %v675 = vunpack.c.l.b16 %v120
    %v676 = vunpack.c.h.b16 %v120
    %v677 = vunpack.c.l.b16 %v121
    %v678 = vunpack.c.h.b16 %v121
    %v679 = vunpack.c.l.b16 %v122
    %v680 = vunpack.c.h.b16 %v122
    %v681 = vunpack.c.l.b16 %v123
    %v682 = vunpack.c.h.b16 %v123
    %v683 = vunpack.c.l.b16 %v124
    %v684 = vunpack.c.h.b16 %v124
    %v685 = vunpack.c.l.b16 %v125
    %v686 = vunpack.c.h.b16 %v125
    %v687 = vunpack.c.l.b16 %v126
    %v688 = vunpack.c.h.b16 %v126
    %v689 = vunpack.c.l.b16 %v127
    %v690 = vunpack.c.h.b16 %v127
    %v691 = vunpack.c.l.b16 %v128
    %v692 = vunpack.c.h.b16 %v128
    %v693 = vunpack.c.l.b16 %v129
    %v694 = vunpack.c.h.b16 %v129
    %v695 = vunpack.c.l.b16 %v130
    %v696 = vunpack.c.h.b16 %v130
    %v697 = vunpack.c.l.b16 %v131
    %v698 = vunpack.c.h.b16 %v131
    %v699 = vunpack.c.l.b16 %v132
    %v700 = vunpack.c.h.b16 %v132
    %v701 = vunpack.c.l.b16 %v133
    %v702 = vunpack.c.h.b16 %v133
    %v703 = vunpack.c.l.b16 %v134
    %v704 = vunpack.c.h.b16 %v134
    %v705 = vunpack.c.l.b16 %v135
    %v706 = vunpack.c.h.b16 %v135
    %v707 = vunpack.c.l.b16 %v136
    %v708 = vunpack.c.h.b16 %v136
    %v709 = vunpack.c.l.b16 %v137
    %v710 = vunpack.c.h.b16 %v137
    %v711 = vunpack.c.l.b16 %v138
    %v712 = vunpack.c.h.b16 %v138
    %v713 = vunpack.c.l.b16 %v139
    %v714 = vunpack.c.h.b16 %v139
    %v715 = vunpack.c.l.b16 %v140
    %v716 = vunpack.c.h.b16 %v140
    %v717 = vunpack.c.l.b16 %v141
    %v718 = vunpack.c.h.b16 %v141
    %v719 = vunpack.c.l.b16 %v142
    %v720 = vunpack.c.h.b16 %v142
    %v721 = vunpack.c.l.b16 %v143
    %v722 = vunpack.c.h.b16 %v143
    %v723 = vunpack.c.l.b16 %v144
    %v724 = vunpack.c.h.b16 %v144
    %v725 = vunpack.c.l.b16 %v145
    %v726 = vunpack.c.h.b16 %v145
    %v727 = vunpack.c.l.b16 %v146
    %v728 = vunpack.c.h.b16 %v146
    %v729 = vunpack.c.l.b16 %v147
    %v730 = vunpack.c.h.b16 %v147
    %v731 = vunpack.c.l.b16 %v148
    %v732 = vunpack.c.h.b16 %v148
    %v733 = vunpack.c.l.b16 %v149
    %v734 = vunpack.c.h.b16 %v149
    %v735 = vunpack.c.l.b16 %v150
    %v736 = vunpack.c.h.b16 %v150
    %v737 = vunpack.c.l.b16 %v151
    %v738 = vunpack.c.h.b16 %v151
    %v739 = vunpack.c.l.b16 %v152
    %v740 = vunpack.c.h.b16 %v152
    %v741 = vunpack.c.l.b16 %v153
    %v742 = vunpack.c.h.b16 %v153
    %v743 = vunpack.c.l.b16 %v154
    %v744 = vunpack.c.h.b16 %v154
    %v745 = vunpack.c.l.b16 %v155
    %v746 = vunpack.c.h.b16 %v155
    %v747 = vunpack.c.l.b16 %v156
    %v748 = vunpack.c.h.b16 %v156
    %v749 = vunpack.c.l.b16 %v157
    %v750 = vunpack.c.h.b16 %v157
    %v751 = vunpack.c.l.b16 %v158
    %v752 = vunpack.c.h.b16 %v158
    %v753 = vunpack.c.l.b16 %v159
    %v754 = vunpack.c.h.b16 %v159
    %v755 = vunpack.c.l.b16 %v160
    %v756 = vunpack.c.h.b16 %v160
    %v757 = vunpack.c.l.b16 %v161
    %v758 = vunpack.c.h.b16 %v161
    %v759 = vunpack.c.l.b16 %v162
    %v760 = vunpack.c.h.b16 %v162
    %v761 = vunpack.c.l.b16 %v163
    %v762 = vunpack.c.h.b16 %v163
    %v763 = vunpack.c.l.b16 %v164
    %v764 = vunpack.c.h.b16 %v164
    %v765 = vunpack.c.l.b16 %v165
    %v766 = vunpack.c.h.b16 %v165
    %v767 = vunpack.c.l.b16 %v166
    %v768 = vunpack.c.h.b16 %v166
    %v769 = vunpack.c.l.b16 %v167
    %v770 = vunpack.c.h.b16 %v167
    %v771 = vunpack.c.l.b16 %v168
    %v772 = vunpack.c.h.b16 %v168
    %v773 = vunpack.c.l.b16 %v169
    %v774 = vunpack.c.h.b16 %v169
    %v775 = vunpack.c.l.b16 %v170
    %v776 = vunpack.c.h.b16 %v170
    %v777 = vunpack.c.l.b16 %v171
    %v778 = vunpack.c.h.b16 %v171
    %v779 = vunpack.c.l.b16 %v172
    %v780 = vunpack.c.h.b16 %v172
    %v781 = vunpack.c.l.b16 %v173
    %v782 = vunpack.c.h.b16 %v173
    %v783 = vunpack.c.l.b16 %v174
    %v784 = vunpack.c.h.b16 %v174
    %v785 = vunpack.c.l.b16 %v175
    %v786 = vunpack.c.h.b16 %v175
    %v787 = vunpack.c.l.b16 %v176
    %v788 = vunpack.c.h.b16 %v176
    %v789 = vunpack.c.l.b16 %v177
    %v790 = vunpack.c.h.b16 %v177
    %v791 = vunpack.c.l.b16 %v178
    %v792 = vunpack.c.h.b16 %v178
    %v793 = vunpack.c.l.b16 %v179
    %v794 = vunpack.c.h.b16 %v179
    %v795 = vunpack.c.l.b16 %v180
    %v796 = vunpack.c.h.b16 %v180
    %v797 = vunpack.c.l.b16 %v181
    %v798 = vunpack.c.h.b16 %v181
    %v799 = vunpack.c.l.b16 %v182
    %v800 = vunpack.c.h.b16 %v182
    %v801 = vunpack.c.l.b16 %v183
    %v802 = vunpack.c.h.b16 %v183
    %v803 = vunpack.c.l.b16 %v184
    %v804 = vunpack.c.h.b16 %v184
    %v805 = vunpack.c.l.b16 %v185
    %v806 = vunpack.c.h.b16 %v185
    %v807 = vunpack.c.l.b16 %v186
    %v808 = vunpack.c.h.b16 %v186
    %v809 = vunpack.c.l.b16 %v187
    %v810 = vunpack.c.h.b16 %v187
    %v811 = vunpack.c.l.b16 %v188
    %v812 = vunpack.c.h.b16 %v188
    %v813 = vunpack.c.l.b16 %v189
    %v814 = vunpack.c.h.b16 %v189
    %v815 = vunpack.c.l.b16 %v190
    %v816 = vunpack.c.h.b16 %v190
    %v817 = vunpack.c.l.b16 %v191
    %v818 = vunpack.c.h.b16 %v191
    %v819 = vunpack.c.l.b16 %v192
    %v820 = vunpack.c.h.b16 %v192
    %v821 = vunpack.c.l.b16 %v193
    %v822 = vunpack.c.h.b16 %v193
    %v823 = vunpack.c.l.b16 %v194
    %v824 = vunpack.c.h.b16 %v194
    %v825 = vunpack.c.l.b16 %v195
    %v826 = vunpack.c.h.b16 %v195
    %v827 = vunpack.c.l.b16 %v196
    %v828 = vunpack.c.h.b16 %v196
    %v829 = vunpack.c.l.b16 %v197
    %v830 = vunpack.c.h.b16 %v197
    %v831 = vunpack.c.l.b16 %v198
    %v832 = vunpack.c.h.b16 %v198
    %v833 = vunpack.c.l.b16 %v199
    %v834 = vunpack.c.h.b16 %v199
    %v835 = vunpack.c.l.b16 %v200
    %v836 = vunpack.c.h.b16 %v200
    %v837 = vunpack.c.l.b16 %v201
    %v838 = vunpack.c.h.b16 %v201
    %v839 = vunpack.c.l.b16 %v202
    %v840 = vunpack.c.h.b16 %v202
    %v841 = vunpack.c.l.b16 %v203
    %v842 = vunpack.c.h.b16 %v203
    %v843 = vunpack.c.l.b16 %v204
    %v844 = vunpack.c.h.b16 %v204
    %v845 = vunpack.c.l.b16 %v205
    %v846 = vunpack.c.h.b16 %v205
    %v847 = vunpack.c.l.b16 %v206
    %v848 = vunpack.c.h.b16 %v206
    %v849 = vunpack.c.l.b16 %v207
    %v850 = vunpack.c.h.b16 %v207
    %v851 = vunpack.c.l.b16 %v208
    %v852 = vunpack.c.h.b16 %v208
    %v853 = vunpack.c.l.b16 %v209
    %v854 = vunpack.c.h.b16 %v209
    %v855 = vunpack.c.l.b16 %v210
    %v856 = vunpack.c.h.b16 %v210
    %v857 = vunpack.c.l.b16 %v211
    %v858 = vunpack.c.h.b16 %v211
    %v859 = vunpack.c.l.b16 %v212
    %v860 = vunpack.c.h.b16 %v212
    %v861 = vunpack.c.l.b16 %v213
    %v862 = vunpack.c.h.b16 %v213
    %v863 = vunpack.c.l.b16 %v214
    %v864 = vunpack.c.h.b16 %v214
    %v865 = vunpack.c.l.b16 %v215
    %v866 = vunpack.c.h.b16 %v215
    %v867 = vunpack.c.l.b16 %v216
    %v868 = vunpack.c.h.b16 %v216
    %v869 = vunpack.c.l.b16 %v217
    %v870 = vunpack.c.h.b16 %v217
    %v871 = vunpack.c.l.b16 %v218
    %v872 = vunpack.c.h.b16 %v218
    %v873 = vunpack.c.l.b16 %v219
    %v874 = vunpack.c.h.b16 %v219
    %v875 = vunpack.c.l.b16 %v220
    %v876 = vunpack.c.h.b16 %v220
    %v877 = vunpack.c.l.b16 %v221
    %v878 = vunpack.c.h.b16 %v221
    %v879 = vunpack.c.l.b16 %v222
    %v880 = vunpack.c.h.b16 %v222
    %v881 = vunpack.c.l.b16 %v223
    %v882 = vunpack.c.h.b16 %v223
    %v883 = vunpack.c.l.b16 %v224
    %v884 = vunpack.c.h.b16 %v224
    %v885 = vunpack.c.l.b16 %v225
    %v886 = vunpack.c.h.b16 %v225
    %v887 = vunpack.c.l.b16 %v226
    %v888 = vunpack.c.h.b16 %v226
    %v889 = vunpack.c.l.b16 %v227
    %v890 = vunpack.c.h.b16 %v227
    %v891 = vunpack.c.l.b16 %v228
    %v892 = vunpack.c.h.b16 %v228
    %v893 = vunpack.c.l.b16 %v229
    %v894 = vunpack.c.h.b16 %v229
    %v895 = vunpack.c.l.b16 %v230
    %v896 = vunpack.c.h.b16 %v230
    %v897 = vunpack.c.l.b16 %v231
    %v898 = vunpack.c.h.b16 %v231
    %v899 = vunpack.c.l.b16 %v232
    %v900 = vunpack.c.h.b16 %v232
    %v901 = vunpack.c.l.b16 %v233
    %v902 = vunpack.c.h.b16 %v233
    %v903 = vunpack.c.l.b16 %v234
    %v904 = vunpack.c.h.b16 %v234
    %v905 = vunpack.c.l.b16 %v235
    %v906 = vunpack.c.h.b16 %v235
    %v907 = vunpack.c.l.b16 %v236
    %v908 = vunpack.c.h.b16 %v236
    %v909 = vunpack.c.l.b16 %v237
    %v910 = vunpack.c.h.b16 %v237
    %v911 = vunpack.c.l.b16 %v238
    %v912 = vunpack.c.h.b16 %v238
    %v913 = vunpack.c.l.b16 %v239
    %v914 = vunpack.c.h.b16 %v239
    %v915 = vunpack.c.l.b16 %v240
    %v916 = vunpack.c.h.b16 %v240
    %v917 = vunpack.c.l.b16 %v241
    %v918 = vunpack.c.h.b16 %v241
    %v919 = vunpack.c.l.b16 %v242
    %v920 = vunpack.c.h.b16 %v242
    %v921 = vunpack.c.l.b16 %v243
    %v922 = vunpack.c.h.b16 %v243
    %v923 = vunpack.c.l.b16 %v244
    %v924 = vunpack.c.h.b16 %v244
    %v925 = vunpack.c.l.b16 %v245
    %v926 = vunpack.c.h.b16 %v245
    %v927 = vunpack.c.l.b16 %v246
    %v928 = vunpack.c.h.b16 %v246
    %v929 = vunpack.c.l.b16 %v247
    %v930 = vunpack.c.h.b16 %v247
    %v931 = vunpack.c.l.b16 %v248
    %v932 = vunpack.c.h.b16 %v248
    %v933 = vunpack.c.l.b16 %v249
    %v934 = vunpack.c.h.b16 %v249
    %v935 = vunpack.c.l.b16 %v250
    %v936 = vunpack.c.h.b16 %v250
    %v937 = vunpack.c.l.b16 %v251
    %v938 = vunpack.c.h.b16 %v251
    %v939 = vunpack.c.l.b16 %v252
    %v940 = vunpack.c.h.b16 %v252
    %v941 = vunpack.c.l.b16 %v253
    %v942 = vunpack.c.h.b16 %v253
    %v943 = vunpack.c.l.b16 %v254
    %v944 = vunpack.c.h.b16 %v254
    %v945 = vunpack.c.l.b16 %v255
    %v946 = vunpack.c.h.b16 %v255
    %v947 = vunpack.c.l.b16 %v256
    %v948 = vunpack.c.h.b16 %v256
    %v949 = vunpack.c.l.b16 %v257
    %v950 = vunpack.c.h.b16 %v257
    %v951 = vunpack.c.l.b16 %v258
    %v952 = vunpack.c.h.b16 %v258
    %v953 = vunpack.c.l.b16 %v259
    %v954 = vunpack.c.h.b16 %v259
    %v955 = vunpack.c.l.b16 %v260
    %v956 = vunpack.c.h.b16 %v260
    %v957 = vunpack.c.l.b16 %v261
    %v958 = vunpack.c.h.b16 %v261
    %v959 = vunpack.c.l.b16 %v262
    %v960 = vunpack.c.h.b16 %v262
    %v961 = vunpack.c.l.b16 %v263
    %v962 = vunpack.c.h.b16 %v263
    %v963 = vunpack.c.l.b16 %v264
    %v964 = vunpack.c.h.b16 %v264
    %v965 = vunpack.c.l.b16 %v265
    %v966 = vunpack.c.h.b16 %v265
    %v967 = vunpack.c.l.b16 %v266
    %v968 = vunpack.c.h.b16 %v266
    %v969 = vunpack.c.l.b16 %v267
    %v970 = vunpack.c.h.b16 %v267
    %v971 = vunpack.c.l.b16 %v268
    %v972 = vunpack.c.h.b16 %v268
    %v973 = vunpack.c.l.b16 %v269
    %v974 = vunpack.c.h.b16 %v269
    %v975 = vunpack.c.l.b16 %v270
    %v976 = vunpack.c.h.b16 %v270
    %v977 = vunpack.c.l.b16 %v271
    %v978 = vunpack.c.h.b16 %v271
    %v979 = vunpack.c.l.b16 %v272
    %v980 = vunpack.c.h.b16 %v272
    %v981 = vunpack.c.l.b16 %v273
    %v982 = vunpack.c.h.b16 %v273
    %v983 = vunpack.c.l.b16 %v274
    %v984 = vunpack.c.h.b16 %v274
    %v985 = vunpack.c.l.b16 %v275
    %v986 = vunpack.c.h.b16 %v275
    %v987 = vunpack.c.l.b16 %v276
    %v988 = vunpack.c.h.b16 %v276
    %v989 = vunpack.c.l.b16 %v277
    %v990 = vunpack.c.h.b16 %v277
    %v991 = vunpack.c.l.b16 %v278
    %v992 = vunpack.c.h.b16 %v278
    %v993 = vunpack.c.l.b16 %v279
    %v994 = vunpack.c.h.b16 %v279
    %v995 = vunpack.c.l.b16 %v280
    %v996 = vunpack.c.h.b16 %v280
    %v997 = vunpack.c.l.b16 %v281
    %v998 = vunpack.c.h.b16 %v281
    %v999 = vunpack.c.l.b16 %v282
    %v1000 = vunpack.c.h.b16 %v282
    %v1001 = vunpack.c.l.b16 %v283
    %v1002 = vunpack.c.h.b16 %v283
    %v1003 = vunpack.c.l.b16 %v284
    %v1004 = vunpack.c.h.b16 %v284
    %v1005 = vunpack.c.l.b16 %v285
    %v1006 = vunpack.c.h.b16 %v285
    %v1007 = vunpack.c.l.b16 %v286
    %v1008 = vunpack.c.h.b16 %v286
    %v1009 = vunpack.c.l.b16 %v287
    %v1010 = vunpack.c.h.b16 %v287
    %v1011 = vunpack.c.l.b16 %v288
    %v1012 = vunpack.c.h.b16 %v288
    %v1013 = vunpack.c.l.b16 %v289
    %v1014 = vunpack.c.h.b16 %v289
    %v1015 = vunpack.c.l.b16 %v290
    %v1016 = vunpack.c.h.b16 %v290
    %v1017 = vunpack.c.l.b16 %v291
    %v1018 = vunpack.c.h.b16 %v291
    %v1019 = vunpack.c.l.b16 %v292
    %v1020 = vunpack.c.h.b16 %v292
    %v1021 = vunpack.c.l.b16 %v293
    %v1022 = vunpack.c.h.b16 %v293
    %v1023 = vunpack.c.l.b16 %v294
    %v1024 = vunpack.c.h.b16 %v294
    %v1025 = vunpack.c.l.b16 %v295
    %v1026 = vunpack.c.h.b16 %v295
    %v1027 = vunpack.c.l.b16 %v296
    %v1028 = vunpack.c.h.b16 %v296
    %v1029 = vunpack.c.l.b16 %v297
    %v1030 = vunpack.c.h.b16 %v297
    %v1031 = vunpack.c.l.b16 %v298
    %v1032 = vunpack.c.h.b16 %v298
    %v1033 = vunpack.c.l.b16 %v299
    %v1034 = vunpack.c.h.b16 %v299
    %v1035 = vunpack.c.l.b16 %v300
    %v1036 = vunpack.c.h.b16 %v300
    %v1037 = vunpack.c.l.b16 %v301
    %v1038 = vunpack.c.h.b16 %v301
    %v1039 = vunpack.c.l.b16 %v302
    %v1040 = vunpack.c.h.b16 %v302
    %v1041 = vunpack.c.l.b16 %v303
    %v1042 = vunpack.c.h.b16 %v303
    %v1043 = vunpack.c.l.b16 %v304
    %v1044 = vunpack.c.h.b16 %v304
    %v1045 = vunpack.c.l.b16 %v305
    %v1046 = vunpack.c.h.b16 %v305
    %v1047 = vunpack.c.l.b16 %v306
    %v1048 = vunpack.c.h.b16 %v306
    %v1049 = vunpack.c.l.b16 %v307
    %v1050 = vunpack.c.h.b16 %v307
    %v1051 = vunpack.c.l.b16 %v308
    %v1052 = vunpack.c.h.b16 %v308
    %v1053 = vunpack.c.l.b16 %v309
    %v1054 = vunpack.c.h.b16 %v309
    %v1055 = vunpack.c.l.b16 %v310
    %v1056 = vunpack.c.h.b16 %v310
    %v1057 = vunpack.c.l.b16 %v311
    %v1058 = vunpack.c.h.b16 %v311
    %v1059 = vunpack.c.l.b16 %v312
    %v1060 = vunpack.c.h.b16 %v312
    %v1061 = vunpack.c.l.b16 %v313
    %v1062 = vunpack.c.h.b16 %v313
    %v1063 = vunpack.c.l.b16 %v314
    %v1064 = vunpack.c.h.b16 %v314
    %v1065 = vunpack.c.l.b16 %v315
    %v1066 = vunpack.c.h.b16 %v315
    %v1067 = vunpack.c.l.b16 %v316
    %v1068 = vunpack.c.h.b16 %v316
    %v1069 = vunpack.c.l.b16 %v317
    %v1070 = vunpack.c.h.b16 %v317
    %v1071 = vunpack.c.l.b16 %v318
    %v1072 = vunpack.c.h.b16 %v318
    %v1073 = vunpack.c.l.b16 %v319
    %v1074 = vunpack.c.h.b16 %v319
    %v1075 = vunpack.c.l.b16 %v320
    %v1076 = vunpack.c.h.b16 %v320
    %v1077 = vunpack.c.l.b16 %v321
    %v1078 = vunpack.c.h.b16 %v321
    %v1079 = vunpack.c.l.b16 %v322
    %v1080 = vunpack.c.h.b16 %v322
    %v1081 = vunpack.c.l.b16 %v323
    %v1082 = vunpack.c.h.b16 %v323
    %v1083 = vunpack.c.l.b16 %v324
    %v1084 = vunpack.c.h.b16 %v324
    %v1085 = vunpack.c.l.b16 %v325
    %v1086 = vunpack.c.h.b16 %v325
    %v1087 = vunpack.c.l.b16 %v326
    %v1088 = vunpack.c.h.b16 %v326
    %v1089 = vunpack.c.l.b16 %v327
    %v1090 = vunpack.c.h.b16 %v327
    %v1091 = vunpack.c.l.b16 %v328
    %v1092 = vunpack.c.h.b16 %v328
    %v1093 = vunpack.c.l.b16 %v329
    %v1094 = vunpack.c.h.b16 %v329
    %v1095 = vunpack.c.l.b16 %v330
    %v1096 = vunpack.c.h.b16 %v330
    %v1097 = vunpack.c.l.b16 %v331
    %v1098 = vunpack.c.h.b16 %v331
    %v1099 = vunpack.c.l.b16 %v332
    %v1100 = vunpack.c.h.b16 %v332
    %v1101 = vunpack.c.l.b16 %v333
    %v1102 = vunpack.c.h.b16 %v333
    %v1103 = vunpack.c.l.b16 %v334
    %v1104 = vunpack.c.h.b16 %v334
    %v1105 = vunpack.c.l.b16 %v335
    %v1106 = vunpack.c.h.b16 %v335
    %v1107 = vunpack.c.l.b16 %v336
    %v1108 = vunpack.c.h.b16 %v336
    %v1109 = vunpack.c.l.b16 %v337
    %v1110 = vunpack.c.h.b16 %v337
    %v1111 = vunpack.c.l.b16 %v338
    %v1112 = vunpack.c.h.b16 %v338
    %v1113 = vunpack.c.l.b16 %v339
    %v1114 = vunpack.c.h.b16 %v339
    %v1115 = vunpack.c.l.b16 %v340
    %v1116 = vunpack.c.h.b16 %v340
    %v1117 = vunpack.c.l.b16 %v341
    %v1118 = vunpack.c.h.b16 %v341
    %v1119 = vunpack.c.l.b16 %v342
    %v1120 = vunpack.c.h.b16 %v342
    %v1121 = vunpack.c.l.b16 %v343
    %v1122 = vunpack.c.h.b16 %v343
    %v1123 = vunpack.c.l.b16 %v344
    %v1124 = vunpack.c.h.b16 %v344
    %v1125 = vunpack.c.l.b16 %v345
    %v1126 = vunpack.c.h.b16 %v345
    %v1127 = vunpack.c.l.b16 %v346
    %v1128 = vunpack.c.h.b16 %v346
    %v1129 = vunpack.c.l.b16 %v347
    %v1130 = vunpack.c.h.b16 %v347
    %v1131 = vunpack.c.l.b16 %v348
    %v1132 = vunpack.c.h.b16 %v348
    %v1133 = vunpack.c.l.b16 %v349
    %v1134 = vunpack.c.h.b16 %v349
    %v1135 = vunpack.c.l.b16 %v350
    %v1136 = vunpack.c.h.b16 %v350
    %v1137 = vunpack.c.l.b16 %v351
    %v1138 = vunpack.c.h.b16 %v351
    %v1139 = vunpack.c.l.b16 %v352
    %v1140 = vunpack.c.h.b16 %v352
    %v1141 = vunpack.c.l.b16 %v353
    %v1142 = vunpack.c.h.b16 %v353
    %v1143 = vunpack.c.l.b16 %v354
    %v1144 = vunpack.c.h.b16 %v354
    %v1145 = vpack.c.b16 %v637, %v633
    %v1146 = vpack.c.b16 %v638, %v634
    %v1147 = vpack.c.b16 %v639, %v635
    %v1148 = vpack.c.b16 %v640, %v636
    %v1149 = vpack.c.b16 %v645, %v641
    %v1150 = vpack.c.b16 %v646, %v642
    %v1151 = vpack.c.b16 %v647, %v643
    %v1152 = vpack.c.b16 %v648, %v644
    %v1153 = vpack.c.b16 %v653, %v649
    %v1154 = vpack.c.b16 %v654, %v650
    %v1155 = vpack.c.b16 %v655, %v651
    %v1156 = vpack.c.b16 %v656, %v652
    %v1157 = vpack.c.b16 %v661, %v657
    %v1158 = vpack.c.b16 %v662, %v658
    %v1159 = vpack.c.b16 %v663, %v659
    %v1160 = vpack.c.b16 %v664, %v660
    %v1161 = vpack.c.b16 %v669, %v665
    %v1162 = vpack.c.b16 %v670, %v666
    %v1163 = vpack.c.b16 %v671, %v667
    %v1164 = vpack.c.b16 %v672, %v668
    %v1165 = vpack.c.b16 %v677, %v673
    %v1166 = vpack.c.b16 %v678, %v674
    %v1167 = vpack.c.b16 %v679, %v675
    %v1168 = vpack.c.b16 %v680, %v676
    %v1169 = vpack.c.b16 %v685, %v681
    %v1170 = vpack.c.b16 %v686, %v682
    %v1171 = vpack.c.b16 %v687, %v683
    %v1172 = vpack.c.b16 %v688, %v684
    %v1173 = vpack.c.b16 %v693, %v689
    %v1174 = vpack.c.b16 %v694, %v690
    %v1175 = vpack.c.b16 %v695, %v691
    %v1176 = vpack.c.b16 %v696, %v692
    %v1177 = vpack.c.b16 %v701, %v697
    %v1178 = vpack.c.b16 %v702, %v698
    %v1179 = vpack.c.b16 %v703, %v699
    %v1180 = vpack.c.b16 %v704, %v700
    %v1181 = vpack.c.b16 %v709, %v705
    %v1182 = vpack.c.b16 %v710, %v706
    %v1183 = vpack.c.b16 %v711, %v707
    %v1184 = vpack.c.b16 %v712, %v708
    %v1185 = vpack.c.b16 %v717, %v713
    %v1186 = vpack.c.b16 %v718, %v714
    %v1187 = vpack.c.b16 %v719, %v715
    %v1188 = vpack.c.b16 %v720, %v716
    %v1189 = vpack.c.b16 %v725, %v721
    %v1190 = vpack.c.b16 %v726, %v722
    %v1191 = vpack.c.b16 %v727, %v723
    %v1192 = vpack.c.b16 %v728, %v724
    %v1193 = vpack.c.b16 %v733, %v729
    %v1194 = vpack.c.b16 %v734, %v730
    %v1195 = vpack.c.b16 %v735, %v731
    %v1196 = vpack.c.b16 %v736, %v732
    %v1197 = vpack.c.b16 %v741, %v737
    %v1198 = vpack.c.b16 %v742, %v738
    %v1199 = vpack.c.b16 %v743, %v739
    %v1200 = vpack.c.b16 %v744, %v740
    %v1201 = vpack.c.b16 %v749, %v745
    %v1202 = vpack.c.b16 %v750, %v746
    %v1203 = vpack.c.b16 %v751, %v747
    %v1204 = vpack.c.b16 %v752, %v748
    %v1205 = vpack.c.b16 %v757, %v753
    %v1206 = vpack.c.b16 %v758, %v754
    %v1207 = vpack.c.b16 %v759, %v755
    %v1208 = vpack.c.b16 %v760, %v756
    %v1209 = vpack.c.b16 %v765, %v761
    %v1210 = vpack.c.b16 %v766, %v762
    %v1211 = vpack.c.b16 %v767, %v763
    %v1212 = vpack.c.b16 %v768, %v764
    %v1213 = vpack.c.b16 %v773, %v769
    %v1214 = vpack.c.b16 %v774, %v770
    %v1215 = vpack.c.b16 %v775, %v771
    %v1216 = vpack.c.b16 %v776, %v772
    %v1217 = vpack.c.b16 %v781, %v777
    %v1218 = vpack.c.b16 %v782, %v778
    %v1219 = vpack.c.b16 %v783, %v779
    %v1220 = vpack.c.b16 %v784, %v780
    %v1221 = vpack.c.b16 %v789, %v785
    %v1222 = vpack.c.b16 %v790, %v786
    %v1223 = vpack.c.b16 %v791, %v787
    %v1224 = vpack.c.b16 %v792, %v788
    %v1225 = vpack.c.b16 %v797, %v793
    %v1226 = vpack.c.b16 %v798, %v794
    %v1227 = vpack.c.b16 %v799, %v795
    %v1228 = vpack.c.b16 %v800, %v796
    %v1229 = vpack.c.b16 %v805, %v801
    %v1230 = vpack.c.b16 %v806, %v802
    %v1231 = vpack.c.b16 %v807, %v803
    %v1232 = vpack.c.b16 %v808, %v804
    %v1233 = vpack.c.b16 %v813, %v809
    %v1234 = vpack.c.b16 %v814, %v810
    %v1235 = vpack.c.b16 %v815, %v811
    %v1236 = vpack.c.b16 %v816, %v812
    %v1237 = vpack.c.b16 %v821, %v817
    %v1238 = vpack.c.b16 %v822, %v818
    %v1239 = vpack.c.b16 %v823, %v819
    %v1240 = vpack.c.b16 %v824, %v820
    %v1241 = vpack.c.b16 %v829, %v825
    %v1242 = vpack.c.b16 %v830, %v826
    %v1243 = vpack.c.b16 %v831, %v827
    %v1244 = vpack.c.b16 %v832, %v828
    %v1245 = vpack.c.b16 %v837, %v833
    %v1246 = vpack.c.b16 %v838, %v834
    %v1247 = vpack.c.b16 %v839, %v835
    %v1248 = vpack.c.b16 %v840, %v836
    %v1249 = vpack.c.b16 %v845, %v841
    %v1250 = vpack.c.b16 %v846, %v842
    %v1251 = vpack.c.b16 %v847, %v843
    %v1252 = vpack.c.b16 %v848, %v844
    %v1253 = vpack.c.b16 %v853, %v849
    %v1254 = vpack.c.b16 %v854, %v850
    %v1255 = vpack.c.b16 %v855, %v851
    %v1256 = vpack.c.b16 %v856, %v852
    %v1257 = vpack.c.b16 %v861, %v857
    %v1258 = vpack.c.b16 %v862, %v858
    %v1259 = vpack.c.b16 %v863, %v859
    %v1260 = vpack.c.b16 %v864, %v860
    %v1261 = vpack.c.b16 %v869, %v865
    %v1262 = vpack.c.b16 %v870, %v866
    %v1263 = vpack.c.b16 %v871, %v867
    %v1264 = vpack.c.b16 %v872, %v868
    %v1265 = vpack.c.b16 %v877, %v873
    %v1266 = vpack.c.b16 %v878, %v874
    %v1267 = vpack.c.b16 %v879, %v875
    %v1268 = vpack.c.b16 %v880, %v876
    %v1269 = vpack.c.b16 %v885, %v881
    %v1270 = vpack.c.b16 %v886, %v882
    %v1271 = vpack.c.b16 %v887, %v883
    %v1272 = vpack.c.b16 %v888, %v884
    %v1273 = vpack.c.b16 %v893, %v889
    %v1274 = vpack.c.b16 %v894, %v890
    %v1275 = vpack.c.b16 %v895, %v891
    %v1276 = vpack.c.b16 %v896, %v892
    %v1277 = vpack.c.b16 %v901, %v897
    %v1278 = vpack.c.b16 %v902, %v898
    %v1279 = vpack.c.b16 %v903, %v899
    %v1280 = vpack.c.b16 %v904, %v900
    %v1281 = vpack.c.b16 %v909, %v905
    %v1282 = vpack.c.b16 %v910, %v906
    %v1283 = vpack.c.b16 %v911, %v907
    %v1284 = vpack.c.b16 %v912, %v908
    %v1285 = vpack.c.b16 %v917, %v913
    %v1286 = vpack.c.b16 %v918, %v914
    %v1287 = vpack.c.b16 %v919, %v915
    %v1288 = vpack.c.b16 %v920, %v916
    %v1289 = vpack.c.b16 %v925, %v921
    %v1290 = vpack.c.b16 %v926, %v922
    %v1291 = vpack.c.b16 %v927, %v923
    %v1292 = vpack.c.b16 %v928, %v924
    %v1293 = vpack.c.b16 %v933, %v929
    %v1294 = vpack.c.b16 %v934, %v930
    %v1295 = vpack.c.b16 %v935, %v931
    %v1296 = vpack.c.b16 %v936, %v932
    %v1297 = vpack.c.b16 %v941, %v937
    %v1298 = vpack.c.b16 %v942, %v938
    %v1299 = vpack.c.b16 %v943, %v939
    %v1300 = vpack.c.b16 %v944, %v940
    %v1301 = vpack.c.b16 %v949, %v945
    %v1302 = vpack.c.b16 %v950, %v946
    %v1303 = vpack.c.b16 %v951, %v947
    %v1304 = vpack.c.b16 %v952, %v948
    %v1305 = vpack.c.b16 %v957, %v953
    %v1306 = vpack.c.b16 %v958, %v954
    %v1307 = vpack.c.b16 %v959, %v955
    %v1308 = vpack.c.b16 %v960, %v956
    %v1309 = vpack.c.b16 %v965, %v961
    %v1310 = vpack.c.b16 %v966, %v962
    %v1311 = vpack.c.b16 %v967, %v963
    %v1312 = vpack.c.b16 %v968, %v964
    %v1313 = vpack.c.b16 %v973, %v969
    %v1314 = vpack.c.b16 %v974, %v970
    %v1315 = vpack.c.b16 %v975, %v971
    %v1316 = vpack.c.b16 %v976, %v972
    %v1317 = vpack.c.b16 %v981, %v977
    %v1318 = vpack.c.b16 %v982, %v978
    %v1319 = vpack.c.b16 %v983, %v979
    %v1320 = vpack.c.b16 %v984, %v980
    %v1321 = vpack.c.b16 %v989, %v985
    %v1322 = vpack.c.b16 %v990, %v986
    %v1323 = vpack.c.b16 %v991, %v987
    %v1324 = vpack.c.b16 %v992, %v988
    %v1325 = vpack.c.b16 %v997, %v993
    %v1326 = vpack.c.b16 %v998, %v994
    %v1327 = vpack.c.b16 %v999, %v995
    %v1328 = vpack.c.b16 %v1000, %v996
    %v1329 = vpack.c.b16 %v1005, %v1001
    %v1330 = vpack.c.b16 %v1006, %v1002
    %v1331 = vpack.c.b16 %v1007, %v1003
    %v1332 = vpack.c.b16 %v1008, %v1004
    %v1333 = vpack.c.b16 %v1013, %v1009
    %v1334 = vpack.c.b16 %v1014, %v1010
    %v1335 = vpack.c.b16 %v1015, %v1011
    %v1336 = vpack.c.b16 %v1016, %v1012
    %v1337 = vpack.c.b16 %v1021, %v1017
    %v1338 = vpack.c.b16 %v1022, %v1018
    %v1339 = vpack.c.b16 %v1023, %v1019
    %v1340 = vpack.c.b16 %v1024, %v1020
    %v1341 = vpack.c.b16 %v1029, %v1025
    %v1342 = vpack.c.b16 %v1030, %v1026
    %v1343 = vpack.c.b16 %v1031, %v1027
    %v1344 = vpack.c.b16 %v1032, %v1028
    %v1345 = vpack.c.b16 %v1037, %v1033
    %v1346 = vpack.c.b16 %v1038, %v1034
    %v1347 = vpack.c.b16 %v1039, %v1035
    %v1348 = vpack.c.b16 %v1040, %v1036
    %v1349 = vpack.c.b16 %v1045, %v1041
    %v1350 = vpack.c.b16 %v1046, %v1042
    %v1351 = vpack.c.b16 %v1047, %v1043
    %v1352 = vpack.c.b16 %v1048, %v1044
    %v1353 = vpack.c.b16 %v1053, %v1049
    %v1354 = vpack.c.b16 %v1054, %v1050
    %v1355 = vpack.c.b16 %v1055, %v1051
    %v1356 = vpack.c.b16 %v1056, %v1052
    %v1357 = vpack.c.b16 %v1061, %v1057
    %v1358 = vpack.c.b16 %v1062, %v1058
    %v1359 = vpack.c.b16 %v1063, %v1059
    %v1360 = vpack.c.b16 %v1064, %v1060
    %v1361 = vpack.c.b16 %v1069, %v1065
    %v1362 = vpack.c.b16 %v1070, %v1066
    %v1363 = vpack.c.b16 %v1071, %v1067
    %v1364 = vpack.c.b16 %v1072, %v1068
    %v1365 = vpack.c.b16 %v1077, %v1073
    %v1366 = vpack.c.b16 %v1078, %v1074
    %v1367 = vpack.c.b16 %v1079, %v1075
    %v1368 = vpack.c.b16 %v1080, %v1076
    %v1369 = vpack.c.b16 %v1085, %v1081
    %v1370 = vpack.c.b16 %v1086, %v1082
    %v1371 = vpack.c.b16 %v1087, %v1083
    %v1372 = vpack.c.b16 %v1088, %v1084
    %v1373 = vpack.c.b16 %v1093, %v1089
    %v1374 = vpack.c.b16 %v1094, %v1090
    %v1375 = vpack.c.b16 %v1095, %v1091
    %v1376 = vpack.c.b16 %v1096, %v1092
    %v1377 = vpack.c.b16 %v1101, %v1097
    %v1378 = vpack.c.b16 %v1102, %v1098
    %v1379 = vpack.c.b16 %v1103, %v1099
    %v1380 = vpack.c.b16 %v1104, %v1100
    %v1381 = vpack.c.b16 %v1109, %v1105
    %v1382 = vpack.c.b16 %v1110, %v1106
    %v1383 = vpack.c.b16 %v1111, %v1107
    %v1384 = vpack.c.b16 %v1112, %v1108
    %v1385 = vpack.c.b16 %v1117, %v1113
    %v1386 = vpack.c.b16 %v1118, %v1114
    %v1387 = vpack.c.b16 %v1119, %v1115
    %v1388 = vpack.c.b16 %v1120, %v1116
    %v1389 = vpack.c.b16 %v1125, %v1121
    %v1390 = vpack.c.b16 %v1126, %v1122
    %v1391 = vpack.c.b16 %v1127, %v1123
    %v1392 = vpack.c.b16 %v1128, %v1124
    %v1393 = vpack.c.b16 %v1133, %v1129
    %v1394 = vpack.c.b16 %v1134, %v1130
    %v1395 = vpack.c.b16 %v1135, %v1131
    %v1396 = vpack.c.b16 %v1136, %v1132
    %v1397 = vpack.c.b16 %v1141, %v1137
    %v1398 = vpack.c.b16 %v1142, %v1138
    %v1399 = vpack.c.b16 %v1143, %v1139
    %v1400 = vpack.c.b16 %v1144, %v1140
    %1657 = vmatprep.subr.bf16.mxu0 %v1174
    %1658 = vmatpush1.bf16.msra.mxu0 %v1173
    %1659 = vmatprep.subr.bf16.mxu0 %v1170
    %1660 = vmatpush1.bf16.msra.mxu0 %v1169
    %1661 = vmatprep.subr.bf16.mxu0 %v1166
    %1662 = vmatpush1.bf16.msra.mxu0 %v1165
    %1663 = vmatprep.subr.bf16.mxu0 %v1162
    %1664 = vmatpush1.bf16.msra.mxu0 %v1161
    %1665 = vmatprep.subr.bf16.mxu0 %v1158
    %1666 = vmatpush1.bf16.msra.mxu0 %v1157
    %1667 = vmatprep.subr.bf16.mxu0 %v1154
    %1668 = vmatpush1.bf16.msra.mxu0 %v1153
    %1669 = vmatprep.subr.bf16.mxu0 %v1150
    %1670 = vmatpush1.bf16.msra.mxu0 %v1149
    %1671 = vmatprep.subr.bf16.mxu0 %v1146
    %1672 = vmatpush1.bf16.msra.mxu0 %v1145
    %1673 = vmatprep.subr.bf16.mxu0 %v1206
    %1674 = vmatpush2.bf16.msra.mxu0 %v1205
    %1675 = vmatprep.subr.bf16.mxu0 %v1202
    %1676 = vmatpush2.bf16.msra.mxu0 %v1201
    %1677 = vmatprep.subr.bf16.mxu0 %v1198
    %1678 = vmatpush2.bf16.msra.mxu0 %v1197
    %1679 = vmatprep.subr.bf16.mxu0 %v1194
    %1680 = vmatpush2.bf16.msra.mxu0 %v1193
    %1681 = vmatprep.subr.bf16.mxu0 %v1190
    %1682 = vmatpush2.bf16.msra.mxu0 %v1189
    %1683 = vmatprep.subr.bf16.mxu0 %v1186
    %1684 = vmatpush2.bf16.msra.mxu0 %v1185
    %1685 = vmatprep.subr.bf16.mxu0 %v1182
    %1686 = vmatpush2.bf16.msra.mxu0 %v1181
    %1687 = vmatprep.subr.bf16.mxu0 %v1178
    %1688 = vmatpush2.bf16.msra.mxu0 %v1177
    %1689 = vmatprep.mubr.bf16.mxu0 %v92
    %1690 = vmatmul.mubr.bf16.gmra.mxu0 %v91
    %v1691 = vpop.f32.mrf.mxu0
    %v1692 = vadd.f32 %v360, %v1691
    %v1693 = vpop.f32.mrf.mxu0
    %v1694 = vadd.f32 %v364, %v1693
    %v1695 = vpop.f32.mrf.mxu0
    %v1696 = vadd.f32 %v360, %v1695
    %v1697 = vpop.f32.mrf.mxu0
    %v1698 = vadd.f32 %v364, %v1697
    %1699 = vdwg.mxu0
    %1700 = vmatprep.subr.bf16.mxu0 %v1238
    %1701 = vmatpush1.bf16.msra.mxu0 %v1237
    %1702 = vmatprep.subr.bf16.mxu0 %v1234
    %1703 = vmatpush1.bf16.msra.mxu0 %v1233
    %1704 = vmatprep.subr.bf16.mxu0 %v1230
    %1705 = vmatpush1.bf16.msra.mxu0 %v1229
    %1706 = vmatprep.subr.bf16.mxu0 %v1226
    %1707 = vmatpush1.bf16.msra.mxu0 %v1225
    %1708 = vmatprep.subr.bf16.mxu0 %v1222
    %1709 = vmatpush1.bf16.msra.mxu0 %v1221
    %1710 = vmatprep.subr.bf16.mxu0 %v1218
    %1711 = vmatpush1.bf16.msra.mxu0 %v1217
    %1712 = vmatprep.subr.bf16.mxu0 %v1214
    %1713 = vmatpush1.bf16.msra.mxu0 %v1213
    %1714 = vmatprep.subr.bf16.mxu0 %v1210
    %1715 = vmatpush1.bf16.msra.mxu0 %v1209
    %1716 = vmatprep.subr.bf16.mxu0 %v1270
    %1717 = vmatpush2.bf16.msra.mxu0 %v1269
    %1718 = vmatprep.subr.bf16.mxu0 %v1266
    %1719 = vmatpush2.bf16.msra.mxu0 %v1265
    %1720 = vmatprep.subr.bf16.mxu0 %v1262
    %1721 = vmatpush2.bf16.msra.mxu0 %v1261
    %1722 = vmatprep.subr.bf16.mxu0 %v1258
    %1723 = vmatpush2.bf16.msra.mxu0 %v1257
    %1724 = vmatprep.subr.bf16.mxu0 %v1254
    %1725 = vmatpush2.bf16.msra.mxu0 %v1253
    %1726 = vmatprep.subr.bf16.mxu0 %v1250
    %1727 = vmatpush2.bf16.msra.mxu0 %v1249
    %1728 = vmatprep.subr.bf16.mxu0 %v1246
    %1729 = vmatpush2.bf16.msra.mxu0 %v1245
    %1730 = vmatprep.subr.bf16.mxu0 %v1242
    %1731 = vmatpush2.bf16.msra.mxu0 %v1241
    %1732 = vmatprep.mubr.bf16.mxu0 %v94
    %1733 = vmatmul.mubr.bf16.gmra.mxu0 %v93
    %v1734 = vpop.f32.mrf.mxu0
    %v1735 = vadd.f32 %v1692, %v1734
    %v1736 = vpop.f32.mrf.mxu0
    %v1737 = vadd.f32 %v1694, %v1736
    %v1738 = vpop.f32.mrf.mxu0
    %v1739 = vadd.f32 %v1696, %v1738
    %v1740 = vpop.f32.mrf.mxu0
    %v1741 = vadd.f32 %v1698, %v1740
    %1742 = vdwg.mxu0
    %1743 = vmatprep.subr.bf16.mxu0 %v1302
    %1744 = vmatpush1.bf16.msra.mxu0 %v1301
    %1745 = vmatprep.subr.bf16.mxu0 %v1298
    %1746 = vmatpush1.bf16.msra.mxu0 %v1297
    %1747 = vmatprep.subr.bf16.mxu0 %v1294
    %1748 = vmatpush1.bf16.msra.mxu0 %v1293
    %1749 = vmatprep.subr.bf16.mxu0 %v1290
    %1750 = vmatpush1.bf16.msra.mxu0 %v1289
    %1751 = vmatprep.subr.bf16.mxu0 %v1286
    %1752 = vmatpush1.bf16.msra.mxu0 %v1285
    %1753 = vmatprep.subr.bf16.mxu0 %v1282
    %1754 = vmatpush1.bf16.msra.mxu0 %v1281
    %1755 = vmatprep.subr.bf16.mxu0 %v1278
    %1756 = vmatpush1.bf16.msra.mxu0 %v1277
    %1757 = vmatprep.subr.bf16.mxu0 %v1274
    %1758 = vmatpush1.bf16.msra.mxu0 %v1273
    %1759 = vmatprep.subr.bf16.mxu0 %v1334
    %1760 = vmatpush2.bf16.msra.mxu0 %v1333
    %1761 = vmatprep.subr.bf16.mxu0 %v1330
    %1762 = vmatpush2.bf16.msra.mxu0 %v1329
    %1763 = vmatprep.subr.bf16.mxu0 %v1326
    %1764 = vmatpush2.bf16.msra.mxu0 %v1325
    %1765 = vmatprep.subr.bf16.mxu0 %v1322
    %1766 = vmatpush2.bf16.msra.mxu0 %v1321
    %1767 = vmatprep.subr.bf16.mxu0 %v1318
    %1768 = vmatpush2.bf16.msra.mxu0 %v1317
    %1769 = vmatprep.subr.bf16.mxu0 %v1314
    %1770 = vmatpush2.bf16.msra.mxu0 %v1313
    %1771 = vmatprep.subr.bf16.mxu0 %v1310
    %1772 = vmatpush2.bf16.msra.mxu0 %v1309
    %1773 = vmatprep.subr.bf16.mxu0 %v1306
    %1774 = vmatpush2.bf16.msra.mxu0 %v1305
    %1775 = vmatprep.mubr.bf16.mxu0 %v96
    %1776 = vmatmul.mubr.bf16.gmra.mxu0 %v95
    %v1777 = vpop.f32.mrf.mxu0
    %v1778 = vadd.f32 %v1735, %v1777
    %v1779 = vpop.f32.mrf.mxu0
    %v1780 = vadd.f32 %v1737, %v1779
    %v1781 = vpop.f32.mrf.mxu0
    %v1782 = vadd.f32 %v1739, %v1781
    %v1783 = vpop.f32.mrf.mxu0
    %v1784 = vadd.f32 %v1741, %v1783
    %1785 = vdwg.mxu0
    %1786 = vmatprep.subr.bf16.mxu0 %v1366
    %1787 = vmatpush1.bf16.msra.mxu0 %v1365
    %1788 = vmatprep.subr.bf16.mxu0 %v1362
    %1789 = vmatpush1.bf16.msra.mxu0 %v1361
    %1790 = vmatprep.subr.bf16.mxu0 %v1358
    %1791 = vmatpush1.bf16.msra.mxu0 %v1357
    %1792 = vmatprep.subr.bf16.mxu0 %v1354
    %1793 = vmatpush1.bf16.msra.mxu0 %v1353
    %1794 = vmatprep.subr.bf16.mxu0 %v1350
    %1795 = vmatpush1.bf16.msra.mxu0 %v1349
    %1796 = vmatprep.subr.bf16.mxu0 %v1346
    %1797 = vmatpush1.bf16.msra.mxu0 %v1345
    %1798 = vmatprep.subr.bf16.mxu0 %v1342
    %1799 = vmatpush1.bf16.msra.mxu0 %v1341
    %1800 = vmatprep.subr.bf16.mxu0 %v1338
    %1801 = vmatpush1.bf16.msra.mxu0 %v1337
    %1802 = vmatprep.subr.bf16.mxu0 %v1398
    %1803 = vmatpush2.bf16.msra.mxu0 %v1397
    %1804 = vmatprep.subr.bf16.mxu0 %v1394
    %1805 = vmatpush2.bf16.msra.mxu0 %v1393
    %1806 = vmatprep.subr.bf16.mxu0 %v1390
    %1807 = vmatpush2.bf16.msra.mxu0 %v1389
    %1808 = vmatprep.subr.bf16.mxu0 %v1386
    %1809 = vmatpush2.bf16.msra.mxu0 %v1385
    %1810 = vmatprep.subr.bf16.mxu0 %v1382
    %1811 = vmatpush2.bf16.msra.mxu0 %v1381
    %1812 = vmatprep.subr.bf16.mxu0 %v1378
    %1813 = vmatpush2.bf16.msra.mxu0 %v1377
    %1814 = vmatprep.subr.bf16.mxu0 %v1374
    %1815 = vmatpush2.bf16.msra.mxu0 %v1373
    %1816 = vmatprep.subr.bf16.mxu0 %v1370
    %1817 = vmatpush2.bf16.msra.mxu0 %v1369
    %1818 = vmatprep.mubr.bf16.mxu0 %v98
    %1819 = vmatmul.mubr.bf16.gmra.mxu0 %v97
    %v1820 = vpop.f32.mrf.mxu0
    %v1821 = vadd.f32 %v1778, %v1820
    %v1822 = vpop.f32.mrf.mxu0
    %v1823 = vadd.f32 %v1780, %v1822
    %v1824 = vpop.f32.mrf.mxu0
    %v1825 = vadd.f32 %v1782, %v1824
    %v1826 = vpop.f32.mrf.mxu0
    %v1827 = vadd.f32 %v1784, %v1826
    %1828 = vdwg.mxu0
    %1829 = vmatprep.subr.bf16.mxu0 %v1176
    %1830 = vmatpush1.bf16.msra.mxu0 %v1175
    %1831 = vmatprep.subr.bf16.mxu0 %v1172
    %1832 = vmatpush1.bf16.msra.mxu0 %v1171
    %1833 = vmatprep.subr.bf16.mxu0 %v1168
    %1834 = vmatpush1.bf16.msra.mxu0 %v1167
    %1835 = vmatprep.subr.bf16.mxu0 %v1164
    %1836 = vmatpush1.bf16.msra.mxu0 %v1163
    %1837 = vmatprep.subr.bf16.mxu0 %v1160
    %1838 = vmatpush1.bf16.msra.mxu0 %v1159
    %1839 = vmatprep.subr.bf16.mxu0 %v1156
    %1840 = vmatpush1.bf16.msra.mxu0 %v1155
    %1841 = vmatprep.subr.bf16.mxu0 %v1152
    %1842 = vmatpush1.bf16.msra.mxu0 %v1151
    %1843 = vmatprep.subr.bf16.mxu0 %v1148
    %1844 = vmatpush1.bf16.msra.mxu0 %v1147
    %1845 = vmatprep.subr.bf16.mxu0 %v1208
    %1846 = vmatpush2.bf16.msra.mxu0 %v1207
    %1847 = vmatprep.subr.bf16.mxu0 %v1204
    %1848 = vmatpush2.bf16.msra.mxu0 %v1203
    %1849 = vmatprep.subr.bf16.mxu0 %v1200
    %1850 = vmatpush2.bf16.msra.mxu0 %v1199
    %1851 = vmatprep.subr.bf16.mxu0 %v1196
    %1852 = vmatpush2.bf16.msra.mxu0 %v1195
    %1853 = vmatprep.subr.bf16.mxu0 %v1192
    %1854 = vmatpush2.bf16.msra.mxu0 %v1191
    %1855 = vmatprep.subr.bf16.mxu0 %v1188
    %1856 = vmatpush2.bf16.msra.mxu0 %v1187
    %1857 = vmatprep.subr.bf16.mxu0 %v1184
    %1858 = vmatpush2.bf16.msra.mxu0 %v1183
    %1859 = vmatprep.subr.bf16.mxu0 %v1180
    %1860 = vmatpush2.bf16.msra.mxu0 %v1179
    %1861 = vmatprep.mubr.bf16.mxu0 %v92
    %1862 = vmatmul.mubr.bf16.gmra.mxu0 %v91
    %v1863 = vpop.f32.mrf.mxu0
    %v1864 = vadd.f32 %v368, %v1863
    %v1865 = vpop.f32.mrf.mxu0
    %v1866 = vadd.f32 %v372, %v1865
    %v1867 = vpop.f32.mrf.mxu0
    %v1868 = vadd.f32 %v368, %v1867
    %v1869 = vpop.f32.mrf.mxu0
    %v1870 = vadd.f32 %v372, %v1869
    %1871 = vdwg.mxu0
    %1872 = vmatprep.subr.bf16.mxu0 %v1240
    %1873 = vmatpush1.bf16.msra.mxu0 %v1239
    %1874 = vmatprep.subr.bf16.mxu0 %v1236
    %1875 = vmatpush1.bf16.msra.mxu0 %v1235
    %1876 = vmatprep.subr.bf16.mxu0 %v1232
    %1877 = vmatpush1.bf16.msra.mxu0 %v1231
    %1878 = vmatprep.subr.bf16.mxu0 %v1228
    %1879 = vmatpush1.bf16.msra.mxu0 %v1227
    %1880 = vmatprep.subr.bf16.mxu0 %v1224
    %1881 = vmatpush1.bf16.msra.mxu0 %v1223
    %1882 = vmatprep.subr.bf16.mxu0 %v1220
    %1883 = vmatpush1.bf16.msra.mxu0 %v1219
    %1884 = vmatprep.subr.bf16.mxu0 %v1216
    %1885 = vmatpush1.bf16.msra.mxu0 %v1215
    %1886 = vmatprep.subr.bf16.mxu0 %v1212
    %1887 = vmatpush1.bf16.msra.mxu0 %v1211
    %1888 = vmatprep.subr.bf16.mxu0 %v1272
    %1889 = vmatpush2.bf16.msra.mxu0 %v1271
    %1890 = vmatprep.subr.bf16.mxu0 %v1268
    %1891 = vmatpush2.bf16.msra.mxu0 %v1267
    %1892 = vmatprep.subr.bf16.mxu0 %v1264
    %1893 = vmatpush2.bf16.msra.mxu0 %v1263
    %1894 = vmatprep.subr.bf16.mxu0 %v1260
    %1895 = vmatpush2.bf16.msra.mxu0 %v1259
    %1896 = vmatprep.subr.bf16.mxu0 %v1256
    %1897 = vmatpush2.bf16.msra.mxu0 %v1255
    %1898 = vmatprep.subr.bf16.mxu0 %v1252
    %1899 = vmatpush2.bf16.msra.mxu0 %v1251
    %1900 = vmatprep.subr.bf16.mxu0 %v1248
    %1901 = vmatpush2.bf16.msra.mxu0 %v1247
    %1902 = vmatprep.subr.bf16.mxu0 %v1244
    %1903 = vmatpush2.bf16.msra.mxu0 %v1243
    %1904 = vmatprep.mubr.bf16.mxu0 %v94
    %1905 = vmatmul.mubr.bf16.gmra.mxu0 %v93
    %v1906 = vpop.f32.mrf.mxu0
    %v1907 = vadd.f32 %v1864, %v1906
    %v1908 = vpop.f32.mrf.mxu0
    %v1909 = vadd.f32 %v1866, %v1908
    %v1910 = vpop.f32.mrf.mxu0
    %v1911 = vadd.f32 %v1868, %v1910
    %v1912 = vpop.f32.mrf.mxu0
    %v1913 = vadd.f32 %v1870, %v1912
    %1914 = vdwg.mxu0
    %1915 = vmatprep.subr.bf16.mxu0 %v1304
    %1916 = vmatpush1.bf16.msra.mxu0 %v1303
    %1917 = vmatprep.subr.bf16.mxu0 %v1300
    %1918 = vmatpush1.bf16.msra.mxu0 %v1299
    %1919 = vmatprep.subr.bf16.mxu0 %v1296
    %1920 = vmatpush1.bf16.msra.mxu0 %v1295
    %1921 = vmatprep.subr.bf16.mxu0 %v1292
    %1922 = vmatpush1.bf16.msra.mxu0 %v1291
    %1923 = vmatprep.subr.bf16.mxu0 %v1288
    %1924 = vmatpush1.bf16.msra.mxu0 %v1287
    %1925 = vmatprep.subr.bf16.mxu0 %v1284
    %1926 = vmatpush1.bf16.msra.mxu0 %v1283
    %1927 = vmatprep.subr.bf16.mxu0 %v1280
    %1928 = vmatpush1.bf16.msra.mxu0 %v1279
    %1929 = vmatprep.subr.bf16.mxu0 %v1276
    %1930 = vmatpush1.bf16.msra.mxu0 %v1275
    %1931 = vmatprep.subr.bf16.mxu0 %v1336
    %1932 = vmatpush2.bf16.msra.mxu0 %v1335
    %1933 = vmatprep.subr.bf16.mxu0 %v1332
    %1934 = vmatpush2.bf16.msra.mxu0 %v1331
    %1935 = vmatprep.subr.bf16.mxu0 %v1328
    %1936 = vmatpush2.bf16.msra.mxu0 %v1327
    %1937 = vmatprep.subr.bf16.mxu0 %v1324
    %1938 = vmatpush2.bf16.msra.mxu0 %v1323
    %1939 = vmatprep.subr.bf16.mxu0 %v1320
    %1940 = vmatpush2.bf16.msra.mxu0 %v1319
    %1941 = vmatprep.subr.bf16.mxu0 %v1316
    %1942 = vmatpush2.bf16.msra.mxu0 %v1315
    %1943 = vmatprep.subr.bf16.mxu0 %v1312
    %1944 = vmatpush2.bf16.msra.mxu0 %v1311
    %1945 = vmatprep.subr.bf16.mxu0 %v1308
    %1946 = vmatpush2.bf16.msra.mxu0 %v1307
    %1947 = vmatprep.mubr.bf16.mxu0 %v96
    %1948 = vmatmul.mubr.bf16.gmra.mxu0 %v95
    %v1949 = vpop.f32.mrf.mxu0
    %v1950 = vadd.f32 %v1907, %v1949
    %v1951 = vpop.f32.mrf.mxu0
    %v1952 = vadd.f32 %v1909, %v1951
    %v1953 = vpop.f32.mrf.mxu0
    %v1954 = vadd.f32 %v1911, %v1953
    %v1955 = vpop.f32.mrf.mxu0
    %v1956 = vadd.f32 %v1913, %v1955
    %1957 = vdwg.mxu0
    %1958 = vmatprep.subr.bf16.mxu0 %v1368
    %1959 = vmatpush1.bf16.msra.mxu0 %v1367
    %1960 = vmatprep.subr.bf16.mxu0 %v1364
    %1961 = vmatpush1.bf16.msra.mxu0 %v1363
    %1962 = vmatprep.subr.bf16.mxu0 %v1360
    %1963 = vmatpush1.bf16.msra.mxu0 %v1359
    %1964 = vmatprep.subr.bf16.mxu0 %v1356
    %1965 = vmatpush1.bf16.msra.mxu0 %v1355
    %1966 = vmatprep.subr.bf16.mxu0 %v1352
    %1967 = vmatpush1.bf16.msra.mxu0 %v1351
    %1968 = vmatprep.subr.bf16.mxu0 %v1348
    %1969 = vmatpush1.bf16.msra.mxu0 %v1347
    %1970 = vmatprep.subr.bf16.mxu0 %v1344
    %1971 = vmatpush1.bf16.msra.mxu0 %v1343
    %1972 = vmatprep.subr.bf16.mxu0 %v1340
    %1973 = vmatpush1.bf16.msra.mxu0 %v1339
    %1974 = vmatprep.subr.bf16.mxu0 %v1400
    %1975 = vmatpush2.bf16.msra.mxu0 %v1399
    %1976 = vmatprep.subr.bf16.mxu0 %v1396
    %1977 = vmatpush2.bf16.msra.mxu0 %v1395
    %1978 = vmatprep.subr.bf16.mxu0 %v1392
    %1979 = vmatpush2.bf16.msra.mxu0 %v1391
    %1980 = vmatprep.subr.bf16.mxu0 %v1388
    %1981 = vmatpush2.bf16.msra.mxu0 %v1387
    %1982 = vmatprep.subr.bf16.mxu0 %v1384
    %1983 = vmatpush2.bf16.msra.mxu0 %v1383
    %1984 = vmatprep.subr.bf16.mxu0 %v1380
    %1985 = vmatpush2.bf16.msra.mxu0 %v1379
    %1986 = vmatprep.subr.bf16.mxu0 %v1376
    %1987 = vmatpush2.bf16.msra.mxu0 %v1375
    %1988 = vmatprep.subr.bf16.mxu0 %v1372
    %1989 = vmatpush2.bf16.msra.mxu0 %v1371
    %1990 = vmatprep.mubr.bf16.mxu0 %v98
    %1991 = vmatmul.mubr.bf16.gmra.mxu0 %v97
    %v1992 = vpop.f32.mrf.mxu0
    %v1993 = vadd.f32 %v1950, %v1992
    %v1994 = vpop.f32.mrf.mxu0
    %v1995 = vadd.f32 %v1952, %v1994
    %v1996 = vpop.f32.mrf.mxu0
    %v1997 = vadd.f32 %v1954, %v1996
    %v1998 = vpop.f32.mrf.mxu0
    %v1999 = vadd.f32 %v1956, %v1998
    %2000 = vdwg.mxu0
    %v2001 = vmax.f32 %v1821, 0.0
    %v2002 = vmax.f32 %v1823, 0.0
    %v2003 = vmax.f32 %v1993, 0.0
    %v2004 = vmax.f32 %v1995, 0.0
    %v2005 = vmax.f32 %v1825, 0.0
    %v2006 = vmax.f32 %v1827, 0.0
    %v2007 = vmax.f32 %v1997, 0.0
    %v2008 = vmax.f32 %v1999, 0.0
    %v2009 = vpack.c.bf16 %v2005, %v2001
    %v2010 = vpack.c.bf16 %v2006, %v2002
    %v2011 = vpack.c.bf16 %v2007, %v2003
    %v2012 = vpack.c.bf16 %v2008, %v2004
    %v2013 = vld [vmem:[#allocation8] sm:$0xf]
    %v2014 = vld [vmem:[#allocation8 + $0x4] sm:$0xf]
    %v2015 = vld [vmem:[#allocation8 + $0x8] sm:$0xf]
    %v2016 = vld [vmem:[#allocation8 + $0xc] sm:$0xf]
    %v2017 = vld [vmem:[#allocation8 + $0x10] sm:$0xf]
    %v2018 = vld [vmem:[#allocation8 + $0x14] sm:$0xf]
    %v2019 = vld [vmem:[#allocation8 + $0x18] sm:$0xf]
    %v2020 = vld [vmem:[#allocation8 + $0x1c] sm:$0xf]
    %v2021 = vld [vmem:[#allocation8 + $0x20] sm:$0xf]
    %v2022 = vld [vmem:[#allocation8 + $0x24] sm:$0xf]
    %v2023 = vld [vmem:[#allocation8 + $0x28] sm:$0xf]
    %v2024 = vld [vmem:[#allocation8 + $0x2c] sm:$0xf]
    %v2025 = vld [vmem:[#allocation8 + $0x30] sm:$0xf]
    %v2026 = vld [vmem:[#allocation8 + $0x34] sm:$0xf]
    %v2027 = vld [vmem:[#allocation8 + $0x38] sm:$0xf]
    %v2028 = vld [vmem:[#allocation8 + $0x3c] sm:$0xf]
    %v2029 = vld [vmem:[#allocation8 + $0x40] sm:$0xf]
    %v2030 = vld [vmem:[#allocation8 + $0x44] sm:$0xf]
    %v2031 = vld [vmem:[#allocation8 + $0x48] sm:$0xf]
    %v2032 = vld [vmem:[#allocation8 + $0x4c] sm:$0xf]
    %v2033 = vld [vmem:[#allocation8 + $0x50] sm:$0xf]
    %v2034 = vld [vmem:[#allocation8 + $0x54] sm:$0xf]
    %v2035 = vld [vmem:[#allocation8 + $0x58] sm:$0xf]
    %v2036 = vld [vmem:[#allocation8 + $0x5c] sm:$0xf]
    %v2037 = vld [vmem:[#allocation8 + $0x60] sm:$0xf]
    %v2038 = vld [vmem:[#allocation8 + $0x64] sm:$0xf]
    %v2039 = vld [vmem:[#allocation8 + $0x68] sm:$0xf]
    %v2040 = vld [vmem:[#allocation8 + $0x6c] sm:$0xf]
    %v2041 = vld [vmem:[#allocation8 + $0x70] sm:$0xf]
    %v2042 = vld [vmem:[#allocation8 + $0x74] sm:$0xf]
    %v2043 = vld [vmem:[#allocation8 + $0x78] sm:$0xf]
    %v2044 = vld [vmem:[#allocation8 + $0x7c] sm:$0xf]
    %v2045 = vld [vmem:[#allocation8 + $0x80] sm:$0xf]
    %v2046 = vld [vmem:[#allocation8 + $0x84] sm:$0xf]
    %v2047 = vld [vmem:[#allocation8 + $0x88] sm:$0xf]
    %v2048 = vld [vmem:[#allocation8 + $0x8c] sm:$0xf]
    %v2049 = vld [vmem:[#allocation8 + $0x90] sm:$0xf]
    %v2050 = vld [vmem:[#allocation8 + $0x94] sm:$0xf]
    %v2051 = vld [vmem:[#allocation8 + $0x98] sm:$0xf]
    %v2052 = vld [vmem:[#allocation8 + $0x9c] sm:$0xf]
    %v2053 = vld [vmem:[#allocation8 + $0xa0] sm:$0xf]
    %v2054 = vld [vmem:[#allocation8 + $0xa4] sm:$0xf]
    %v2055 = vld [vmem:[#allocation8 + $0xa8] sm:$0xf]
    %v2056 = vld [vmem:[#allocation8 + $0xac] sm:$0xf]
    %v2057 = vld [vmem:[#allocation8 + $0xb0] sm:$0xf]
    %v2058 = vld [vmem:[#allocation8 + $0xb4] sm:$0xf]
    %v2059 = vld [vmem:[#allocation8 + $0xb8] sm:$0xf]
    %v2060 = vld [vmem:[#allocation8 + $0xbc] sm:$0xf]
    %v2061 = vld [vmem:[#allocation8 + $0xc0] sm:$0xf]
    %v2062 = vld [vmem:[#allocation8 + $0xc4] sm:$0xf]
    %v2063 = vld [vmem:[#allocation8 + $0xc8] sm:$0xf]
    %v2064 = vld [vmem:[#allocation8 + $0xcc] sm:$0xf]
    %v2065 = vld [vmem:[#allocation8 + $0xd0] sm:$0xf]
    %v2066 = vld [vmem:[#allocation8 + $0xd4] sm:$0xf]
    %v2067 = vld [vmem:[#allocation8 + $0xd8] sm:$0xf]
    %v2068 = vld [vmem:[#allocation8 + $0xdc] sm:$0xf]
    %v2069 = vld [vmem:[#allocation8 + $0xe0] sm:$0xf]
    %v2070 = vld [vmem:[#allocation8 + $0xe4] sm:$0xf]
    %v2071 = vld [vmem:[#allocation8 + $0xe8] sm:$0xf]
    %v2072 = vld [vmem:[#allocation8 + $0xec] sm:$0xf]
    %v2073 = vld [vmem:[#allocation8 + $0xf0] sm:$0xf]
    %v2074 = vld [vmem:[#allocation8 + $0xf4] sm:$0xf]
    %v2075 = vld [vmem:[#allocation8 + $0xf8] sm:$0xf]
    %v2076 = vld [vmem:[#allocation8 + $0xfc] sm:$0xf]
    %v2077 = vld [vmem:[%s4] sm:$0x1]
    %v2079 = vlaneseq
    %v2080 = vshrl.u32 %v2079, 7
    %v2081 = vsub.s32 0, %v2080
    %v2082 = vrot.slane %v2077, %v2081
    %v2148 = vunpack.c.l.b16 %v2013
    %v2149 = vunpack.c.l.b16 %v2014
    %v2150 = vunpack.c.l.b16 %v2015
    %v2151 = vunpack.c.l.b16 %v2016
    %v2152 = vunpack.c.l.b16 %v2017
    %v2153 = vunpack.c.l.b16 %v2018
    %v2154 = vunpack.c.l.b16 %v2019
    %v2155 = vunpack.c.l.b16 %v2020
    %v2156 = vunpack.c.l.b16 %v2021
    %v2157 = vunpack.c.l.b16 %v2022
    %v2158 = vunpack.c.l.b16 %v2023
    %v2159 = vunpack.c.l.b16 %v2024
    %v2160 = vunpack.c.l.b16 %v2025
    %v2161 = vunpack.c.l.b16 %v2026
    %v2162 = vunpack.c.l.b16 %v2027
    %v2163 = vunpack.c.l.b16 %v2028
    %v2164 = vunpack.c.l.b16 %v2029
    %v2165 = vunpack.c.l.b16 %v2030
    %v2166 = vunpack.c.l.b16 %v2031
    %v2167 = vunpack.c.l.b16 %v2032
    %v2168 = vunpack.c.l.b16 %v2033
    %v2169 = vunpack.c.l.b16 %v2034
    %v2170 = vunpack.c.l.b16 %v2035
    %v2171 = vunpack.c.l.b16 %v2036
    %v2172 = vunpack.c.l.b16 %v2037
    %v2173 = vunpack.c.l.b16 %v2038
    %v2174 = vunpack.c.l.b16 %v2039
    %v2175 = vunpack.c.l.b16 %v2040
    %v2176 = vunpack.c.l.b16 %v2041
    %v2177 = vunpack.c.l.b16 %v2042
    %v2178 = vunpack.c.l.b16 %v2043
    %v2179 = vunpack.c.l.b16 %v2044
    %v2180 = vunpack.c.l.b16 %v2045
    %v2181 = vunpack.c.l.b16 %v2046
    %v2182 = vunpack.c.l.b16 %v2047
    %v2183 = vunpack.c.l.b16 %v2048
    %v2184 = vunpack.c.l.b16 %v2049
    %v2185 = vunpack.c.l.b16 %v2050
    %v2186 = vunpack.c.l.b16 %v2051
    %v2187 = vunpack.c.l.b16 %v2052
    %v2188 = vunpack.c.l.b16 %v2053
    %v2189 = vunpack.c.l.b16 %v2054
    %v2190 = vunpack.c.l.b16 %v2055
    %v2191 = vunpack.c.l.b16 %v2056
    %v2192 = vunpack.c.l.b16 %v2057
    %v2193 = vunpack.c.l.b16 %v2058
    %v2194 = vunpack.c.l.b16 %v2059
    %v2195 = vunpack.c.l.b16 %v2060
    %v2196 = vunpack.c.l.b16 %v2061
    %v2197 = vunpack.c.l.b16 %v2062
    %v2198 = vunpack.c.l.b16 %v2063
    %v2199 = vunpack.c.l.b16 %v2064
    %v2200 = vunpack.c.l.b16 %v2065
    %v2201 = vunpack.c.l.b16 %v2066
    %v2202 = vunpack.c.l.b16 %v2067
    %v2203 = vunpack.c.l.b16 %v2068
    %v2204 = vunpack.c.l.b16 %v2069
    %v2205 = vunpack.c.l.b16 %v2070
    %v2206 = vunpack.c.l.b16 %v2071
    %v2207 = vunpack.c.l.b16 %v2072
    %v2208 = vunpack.c.l.b16 %v2073
    %v2209 = vunpack.c.l.b16 %v2074
    %v2210 = vunpack.c.l.b16 %v2075
    %v2211 = vunpack.c.l.b16 %v2076
    %v2212 = vpack.c.b16 %v2149, %v2148
    %v2213 = vpack.c.b16 %v2151, %v2150
    %v2214 = vpack.c.b16 %v2153, %v2152
    %v2215 = vpack.c.b16 %v2155, %v2154
    %v2216 = vpack.c.b16 %v2157, %v2156
    %v2217 = vpack.c.b16 %v2159, %v2158
    %v2218 = vpack.c.b16 %v2161, %v2160
    %v2219 = vpack.c.b16 %v2163, %v2162
    %v2220 = vpack.c.b16 %v2165, %v2164
    %v2221 = vpack.c.b16 %v2167, %v2166
    %v2222 = vpack.c.b16 %v2169, %v2168
    %v2223 = vpack.c.b16 %v2171, %v2170
    %v2224 = vpack.c.b16 %v2173, %v2172
    %v2225 = vpack.c.b16 %v2175, %v2174
    %v2226 = vpack.c.b16 %v2177, %v2176
    %v2227 = vpack.c.b16 %v2179, %v2178
    %v2228 = vpack.c.b16 %v2181, %v2180
    %v2229 = vpack.c.b16 %v2183, %v2182
    %v2230 = vpack.c.b16 %v2185, %v2184
    %v2231 = vpack.c.b16 %v2187, %v2186
    %v2232 = vpack.c.b16 %v2189, %v2188
    %v2233 = vpack.c.b16 %v2191, %v2190
    %v2234 = vpack.c.b16 %v2193, %v2192
    %v2235 = vpack.c.b16 %v2195, %v2194
    %v2236 = vpack.c.b16 %v2197, %v2196
    %v2237 = vpack.c.b16 %v2199, %v2198
    %v2238 = vpack.c.b16 %v2201, %v2200
    %v2239 = vpack.c.b16 %v2203, %v2202
    %v2240 = vpack.c.b16 %v2205, %v2204
    %v2241 = vpack.c.b16 %v2207, %v2206
    %v2242 = vpack.c.b16 %v2209, %v2208
    %v2243 = vpack.c.b16 %v2211, %v2210
    %2276 = vmatprep.subr.bf16.mxu0 0
    %2277 = vmatpush1.bf16.msra.mxu0 %v2219
    %2278 = vmatprep.subr.bf16.mxu0 0
    %2279 = vmatpush1.bf16.msra.mxu0 %v2218
    %2280 = vmatprep.subr.bf16.mxu0 0
    %2281 = vmatpush1.bf16.msra.mxu0 %v2217
    %2282 = vmatprep.subr.bf16.mxu0 0
    %2283 = vmatpush1.bf16.msra.mxu0 %v2216
    %2284 = vmatprep.subr.bf16.mxu0 0
    %2285 = vmatpush1.bf16.msra.mxu0 %v2215
    %2286 = vmatprep.subr.bf16.mxu0 0
    %2287 = vmatpush1.bf16.msra.mxu0 %v2214
    %2288 = vmatprep.subr.bf16.mxu0 0
    %2289 = vmatpush1.bf16.msra.mxu0 %v2213
    %2290 = vmatprep.subr.bf16.mxu0 0
    %2291 = vmatpush1.bf16.msra.mxu0 %v2212
    %2292 = vmatprep.subr.bf16.mxu0 0
    %2293 = vmatpush2.bf16.msra.mxu0 %v2227
    %2294 = vmatprep.subr.bf16.mxu0 0
    %2295 = vmatpush2.bf16.msra.mxu0 %v2226
    %2296 = vmatprep.subr.bf16.mxu0 0
    %2297 = vmatpush2.bf16.msra.mxu0 %v2225
    %2298 = vmatprep.subr.bf16.mxu0 0
    %2299 = vmatpush2.bf16.msra.mxu0 %v2224
    %2300 = vmatprep.subr.bf16.mxu0 0
    %2301 = vmatpush2.bf16.msra.mxu0 %v2223
    %2302 = vmatprep.subr.bf16.mxu0 0
    %2303 = vmatpush2.bf16.msra.mxu0 %v2222
    %2304 = vmatprep.subr.bf16.mxu0 0
    %2305 = vmatpush2.bf16.msra.mxu0 %v2221
    %2306 = vmatprep.subr.bf16.mxu0 0
    %2307 = vmatpush2.bf16.msra.mxu0 %v2220
    %2308 = vmatprep.mubr.bf16.mxu0 %v2010
    %2309 = vmatmul.mubr.bf16.gmra.mxu0 %v2009
    %v2310 = vpop.f32.mrf.mxu0
    %v2311 = vadd.f32 %v2082, %v2310
    %v2312 = vpop.f32.mrf.mxu0
    %v2313 = vpop.f32.mrf.mxu0
    %v2314 = vadd.f32 %v2082, %v2313
    %v2315 = vpop.f32.mrf.mxu0
    %2316 = vdwg.mxu0
    %2317 = vmatprep.subr.bf16.mxu0 0
    %2318 = vmatpush1.bf16.msra.mxu0 %v2235
    %2319 = vmatprep.subr.bf16.mxu0 0
    %2320 = vmatpush1.bf16.msra.mxu0 %v2234
    %2321 = vmatprep.subr.bf16.mxu0 0
    %2322 = vmatpush1.bf16.msra.mxu0 %v2233
    %2323 = vmatprep.subr.bf16.mxu0 0
    %2324 = vmatpush1.bf16.msra.mxu0 %v2232
    %2325 = vmatprep.subr.bf16.mxu0 0
    %2326 = vmatpush1.bf16.msra.mxu0 %v2231
    %2327 = vmatprep.subr.bf16.mxu0 0
    %2328 = vmatpush1.bf16.msra.mxu0 %v2230
    %2329 = vmatprep.subr.bf16.mxu0 0
    %2330 = vmatpush1.bf16.msra.mxu0 %v2229
    %2331 = vmatprep.subr.bf16.mxu0 0
    %2332 = vmatpush1.bf16.msra.mxu0 %v2228
    %2333 = vmatprep.subr.bf16.mxu0 0
    %2334 = vmatpush2.bf16.msra.mxu0 %v2243
    %2335 = vmatprep.subr.bf16.mxu0 0
    %2336 = vmatpush2.bf16.msra.mxu0 %v2242
    %2337 = vmatprep.subr.bf16.mxu0 0
    %2338 = vmatpush2.bf16.msra.mxu0 %v2241
    %2339 = vmatprep.subr.bf16.mxu0 0
    %2340 = vmatpush2.bf16.msra.mxu0 %v2240
    %2341 = vmatprep.subr.bf16.mxu0 0
    %2342 = vmatpush2.bf16.msra.mxu0 %v2239
    %2343 = vmatprep.subr.bf16.mxu0 0
    %2344 = vmatpush2.bf16.msra.mxu0 %v2238
    %2345 = vmatprep.subr.bf16.mxu0 0
    %2346 = vmatpush2.bf16.msra.mxu0 %v2237
    %2347 = vmatprep.subr.bf16.mxu0 0
    %2348 = vmatpush2.bf16.msra.mxu0 %v2236
    %2349 = vmatprep.mubr.bf16.mxu0 %v2012
    %2350 = vmatmul.mubr.bf16.gmra.mxu0 %v2011
    %v2351 = vpop.f32.mrf.mxu0
    %v2352 = vadd.f32 %v2311, %v2351
    %v2353 = vpop.f32.mrf.mxu0
    %v2354 = vpop.f32.mrf.mxu0
    %v2355 = vadd.f32 %v2314, %v2354
    %v2356 = vpop.f32.mrf.mxu0
    %2357 = vdwg.mxu0
    %2358 = vst [vmem:[#allocation10] sm:$0xff] %v2352
    %2359 = vst [vmem:[#allocation10 + $0x8] sm:$0xff] %v2355
    // Predicated region
    $region38: #{tpu_custom_call.1} parent=1 // pred_check
      _
    $region39: #{tpu_custom_call.1} parent=1 // pred_check_branch
      %2361 = sbr.rel (0) target = $region41
    $region40: #{tpu_custom_call.1} parent=1 // pred_region
      %s2363 = ssub.s32 256, 128
      %2364 = vsyncadd [#allocation4], %s2363
      %s2365 = sshll.u32 [#allocation10], 4
      %s2366 = int_to_ptr.vmem [resolvable:$true] %s2365
      %2371 = dma.vmem_to_hbm [thread:$0]  %s2366, 128, %s5, [#allocation4], 128, 128, 8
    $region41: #{tpu_custom_call.1} parent=1 // pred_fallthru
      _
    // Predicated region
    $region42: #{tpu_custom_call.1} parent=1 // pred_check
      _
    $region43: #{tpu_custom_call.1} parent=1 // pred_check_branch
      %2373 = sbr.rel (0) target = $region45
    $region44: #{tpu_custom_call.1} parent=1 // pred_region
      %2374 = dma.done [#allocation4], 256
    $region45: #{tpu_custom_call.1} parent=1 // pred_fallthru
      _
    %2375 = vsyncpa [#allocation3], 1
    %2376 = vsyncpa [#allocation6], 1
    %2377 = vsyncpa [#allocation9], 1
    %2378 = vsyncpa [#allocation4], 1

</llo_original>
